<compile_context>
chip_gen: v7x
topology: tpu7x:2x2x1
jax: 0.10.0
libtpu: 0.0.40
codegen_flags: <defaults>
</compile_context>

<pallas_src>
import math
import functools

import jax
import jax.numpy as jnp
from jax.experimental import pallas as pl
from jax.experimental.pallas import tpu as pltpu


def _round_up(n, m):
    return ((n + m - 1) // m) * m


# ----------------------------------------------------------------------------
# Generation-aware hardware queries (safe fallbacks: v7x-conservative).
# ----------------------------------------------------------------------------
def _vmem_capacity_bytes():
    try:
        return int(pltpu.get_tpu_info().vmem_capacity_bytes)
    except Exception:
        return 64 * 1024 * 1024          # conservative (v7x)


def _is_multicore_chip():
    # Chips whose TensorCores are fed from one grid (megacore): v4 / v5p / v7x.
    try:
        kind = jax.devices()[0].device_kind.lower()
        return ("v7" in kind) or ("v5p" in kind) or ("v4" in kind)
    except Exception:
        return False


# ----------------------------------------------------------------------------
# Kernel: one (Bt, P, D) batch tile per grid step.
# ----------------------------------------------------------------------------
def _make_kernel(fuse_proj):
    def kernel(tgt_ref, mem_ref, pos_ref, *rest):
        if fuse_proj:
            (sa_wqk, sa_wv, sa_wo, ca_wq, ca_wkv, ca_wo,
             l1_w, l1_b, l2_w, head_w, head_b, f2b_w, f2b_b,
             vecs_ref, out_ref) = rest
        else:
            (sa_wq, sa_wk, sa_wv, sa_wo, ca_wq, ca_wk, ca_wv, ca_wo,
             l1_w, l1_b, l2_w, head_w, head_b, f2b_w, f2b_b,
             vecs_ref, out_ref) = rest

        x = tgt_ref[...].astype(jnp.float32)     # bf16 in HBM -> f32 in kernel
        mem = mem_ref[...].astype(jnp.float32)
        pos = pos_ref[...].astype(jnp.float32)
        Bt, P, D = x.shape
        N = Bt * P
        R = out_ref.shape[-1]
        Rpad = f2b_w.shape[-1]
        V = vecs_ref[...]                        # (16, D) packed biases / LN params

        def vrow(i):                             # (1, D): broadcasts over (N,D)/(Bt,P,D)
            return V[i:i + 1, :]

        def mm(a2d, w_ref, bias=None):
            r = jnp.dot(a2d.astype(jnp.bfloat16), w_ref[...],
                        preferred_element_type=jnp.float32)
            if bias is not None:
                r = r + bias
            return r

        def layer_norm(v, g, b):
            mu = jnp.mean(v, axis=-1, keepdims=True)
            vc = v - mu
            var = jnp.mean(vc * vc, axis=-1, keepdims=True)
            return vc * jax.lax.rsqrt(var + 1e-5) * g + b

        def attention(q, k, v):
            # 1/sqrt(D) scale is pre-folded into the q-projection weights/bias.
            s = jnp.einsum("bqd,bkd->bqk",
                           q.astype(jnp.bfloat16), k.astype(jnp.bfloat16),
                           preferred_element_type=jnp.float32)
            s = s - jnp.max(s, axis=-1, keepdims=True)
            p = jnp.exp(s)
            inv = 1.0 / jnp.sum(p, axis=-1, keepdims=True)     # exact, tiny tensor
            return jnp.einsum("bqk,bkd->bqd",
                              (p * inv).astype(jnp.bfloat16), v.astype(jnp.bfloat16),
                              preferred_element_type=jnp.float32)

        # --- self-attention: q = k = tgt + pos, v = tgt ---
        xp = (x + pos).reshape(N, D)
        if fuse_proj:
            qk = mm(xp, sa_wqk)                  # (N, 2D); split lane-aligned (D%128==0)
            q = qk[:, :D] + vrow(0)
            k = qk[:, D:] + vrow(1)
        else:
            q = mm(xp, sa_wq) + vrow(0)
            k = mm(xp, sa_wk) + vrow(1)
        v = mm(x.reshape(N, D), sa_wv) + vrow(2)
        ctx = attention(q.reshape(Bt, P, D), k.reshape(Bt, P, D), v.reshape(Bt, P, D))
        t2 = (mm(ctx.reshape(N, D), sa_wo) + vrow(3)).reshape(Bt, P, D)
        x = layer_norm(x + t2, vrow(9), vrow(10))

        # --- cross-attention: q = x + pos, k = v = memory ---
        xp = (x + pos).reshape(N, D)
        q = mm(xp, ca_wq) + vrow(4)
        memf = mem.reshape(N, D)
        if fuse_proj:
            kv = mm(memf, ca_wkv)                # (N, 2D); lane-aligned split
            k = kv[:, :D] + vrow(5)
            v = kv[:, D:] + vrow(6)
        else:
            k = mm(memf, ca_wk) + vrow(5)
            v = mm(memf, ca_wv) + vrow(6)
        ctx = attention(q.reshape(Bt, P, D), k.reshape(Bt, P, D), v.reshape(Bt, P, D))
        t2 = (mm(ctx.reshape(N, D), ca_wo) + vrow(7)).reshape(Bt, P, D)
        x = layer_norm(x + t2, vrow(11), vrow(12))

        # --- feed-forward ---
        h = jnp.maximum(mm(x.reshape(N, D), l1_w, l1_b[...]), 0.0)     # (N, H)
        t2 = (mm(h, l2_w) + vrow(8)).reshape(Bt, P, D)
        x = mem + layer_norm(x + t2, vrow(13), vrow(14))

        # --- 1x1-conv heads: fused [f1(pad) | f2a] matmul, lane-aligned split ---
        hr = mm(x.reshape(N, D), head_w, head_b[...])                  # (N, Rpad + D)
        y1 = hr[:, :Rpad]
        h2 = jnp.maximum(hr[:, Rpad:], 0.0)                            # (N, D)
        y2 = mm(h2, f2b_w, f2b_b[...])                                 # (N, Rpad)
        out_ref[...] = (y1 + y2)[:, :R].reshape(Bt, P, R)

    return kernel


# ----------------------------------------------------------------------------
# Batch-tile / VMEM sizing helpers.
# ----------------------------------------------------------------------------
def _weight_vmem_bytes(D, H, Rpad):
    bf16_elems = 8 * D * D + 2 * D * H + D * (Rpad + D) + D * Rpad
    f32_elems = H + (Rpad + D) + Rpad + 16 * D
    return 2 * bf16_elems + 4 * f32_elems


def _vmem_estimate_bytes(bt, P, D, H, R, Rpad):
    n = bt * P
    act = 2 * (3 * n * D * 2 + n * R * 4)            # double-buffered activation blocks
    w = 2 * _weight_vmem_bytes(D, H, Rpad)           # weights (assume double-buffered)
    scores = 3 * bt * P * P * 4                      # attention score / prob temporaries
    temps = n * (8 * D + H + 2 * (Rpad + D)) * 4     # rough live f32 intermediates
    return act + w + scores + temps


def _pick_block_b(B, P, D, H, R, Rpad, vmem_budget, multicore):
    """Largest batch tile (divisor of B) that targets >=512 matmul rows, keeps
    >=2 grid blocks only on multi-TensorCore chips, and fits the VMEM budget."""
    target_rows = 512
    target = max(1, min(B, max(1, target_rows // max(P, 1))))
    if multicore and B >= 2:
        target = min(target, max(1, B // 2))
    best = 1
    for cand in range(1, min(B, target) + 1):
        if B % cand == 0 and _vmem_estimate_bytes(cand, P, D, H, R, Rpad) <= vmem_budget:
            best = cand
    return best


# ----------------------------------------------------------------------------
# Wrapper: weight pre-transpose / fusion / bf16 cast + pallas_call.
# ----------------------------------------------------------------------------
@functools.partial(jax.jit, static_argnames=("block_b", "vmem_limit"))
def _trdecoder_impl(tgt_b, mem_b, pos_b, params, *, block_b, vmem_limit):
    B, P, D = tgt_b.shape
    H = params["l1_w"].shape[0]
    R = params["f1_w"].shape[0]
    Rpad = _round_up(R, 128)
    fuse_proj = (D % 128 == 0)            # fused QK/KV only when the split is lane-aligned
    f32, bf16 = jnp.float32, jnp.bfloat16
    scale = 1.0 / math.sqrt(D)            # nhead == 1 -> head_dim == D

    def t_bf16(w, s=None):                # pre-transpose (+ optional scale fold) + bf16
        wt = jnp.asarray(w, f32).T
        if s is not None:
            wt = wt * s
        return wt.astype(bf16)

    sa_w, sa_b = params["sa_in_w"], params["sa_in_b"]
    ca_w, ca_b = params["ca_in_w"], params["ca_in_b"]

    if fuse_proj:
        sa_wqk = jnp.concatenate([t_bf16(sa_w[:D], scale), t_bf16(sa_w[D:2 * D])], axis=1)
        ca_wkv = jnp.concatenate([t_bf16(ca_w[D:2 * D]), t_bf16(ca_w[2 * D:])], axis=1)
        proj = [sa_wqk, t_bf16(sa_w[2 * D:]), t_bf16(params["sa_out_w"]),
                t_bf16(ca_w[:D], scale), ca_wkv, t_bf16(params["ca_out_w"])]
    else:
        proj = [t_bf16(sa_w[:D], scale), t_bf16(sa_w[D:2 * D]), t_bf16(sa_w[2 * D:]),
                t_bf16(params["sa_out_w"]),
                t_bf16(ca_w[:D], scale), t_bf16(ca_w[D:2 * D]), t_bf16(ca_w[2 * D:]),
                t_bf16(params["ca_out_w"])]

    l1_w = t_bf16(params["l1_w"])                                       # (D, H)
    l1_b = jnp.asarray(params["l1_b"], f32).reshape(1, H)
    l2_w = t_bf16(params["l2_w"])                                       # (H, D)

    # Fused 1x1-conv heads: [f1 (padded to Rpad lanes) | f2a] share the same LHS.
    f1_wT = jnp.zeros((D, Rpad), f32).at[:, :R].set(jnp.asarray(params["f1_w"], f32).T)
    head_w = jnp.concatenate([f1_wT, jnp.asarray(params["f2a_w"], f32).T],
                             axis=1).astype(bf16)                       # (D, Rpad + D)
    f1_b = jnp.zeros((1, Rpad), f32).at[:, :R].set(
        jnp.asarray(params["f1_b"], f32).reshape(1, R))
    head_b = jnp.concatenate([f1_b, jnp.asarray(params["f2a_b"], f32).reshape(1, D)], axis=1)
    f2b_w = jnp.zeros((D, Rpad), f32).at[:, :R].set(
        jnp.asarray(params["f2b_w"], f32).T).astype(bf16)               # (D, Rpad)
    f2b_b = jnp.zeros((1, Rpad), f32).at[:, :R].set(
        jnp.asarray(params["f2b_b"], f32).reshape(1, R))

    # Packed (16, D) table of all (1, D) biases / LayerNorm params (1 DMA descriptor).
    rows = [
        jnp.asarray(sa_b[0], f32) * scale,                # 0: self-attn q bias (scaled)
        jnp.asarray(sa_b[1], f32),                        # 1: self-attn k bias
        jnp.asarray(sa_b[2], f32),                        # 2: self-attn v bias
        jnp.asarray(params["sa_out_b"], f32).reshape(-1),  # 3
        jnp.asarray(ca_b[0], f32) * scale,                # 4: cross-attn q bias (scaled)
        jnp.asarray(ca_b[1], f32),                        # 5
        jnp.asarray(ca_b[2], f32),                        # 6
        jnp.asarray(params["ca_out_b"], f32).reshape(-1),  # 7
        jnp.asarray(params["l2_b"], f32).reshape(-1),      # 8
        jnp.asarray(params["n1_g"], f32).reshape(-1),      # 9
        jnp.asarray(params["n1_b"], f32).reshape(-1),      # 10
        jnp.asarray(params["n2_g"], f32).reshape(-1),      # 11
        jnp.asarray(params["n2_b"], f32).reshape(-1),      # 12
        jnp.asarray(params["n3_g"], f32).reshape(-1),      # 13
        jnp.asarray(params["n3_b"], f32).reshape(-1),      # 14
        jnp.zeros((D,), f32),                              # 15: pad to 16 rows
    ]
    vecs = jnp.stack(rows, axis=0)

    weights = proj + [l1_w, l1_b, l2_w, head_w, head_b, f2b_w, f2b_b, vecs]

    bt = block_b
    grid = (B // bt,)

    def act_spec(d):
        return pl.BlockSpec((bt, P, d), lambda b: (b, 0, 0))

    def const_spec(shape):
        zeros = (0,) * len(shape)
        return pl.BlockSpec(shape, lambda b: zeros)

    in_specs = [act_spec(D) for _ in range(3)] + [const_spec(w.shape) for w in weights]

    out = pl.pallas_call(
        _make_kernel(fuse_proj),
        out_shape=jax.ShapeDtypeStruct((B, P, R), jnp.float32),
        grid_spec=pltpu.PrefetchScalarGridSpec(
            num_scalar_prefetch=0,
            grid=grid,
            in_specs=in_specs,
            out_specs=pl.BlockSpec((bt, P, R), lambda b: (b, 0, 0)),
        ),
        compiler_params=pltpu.CompilerParams(
            dimension_semantics=("parallel",),
            vmem_limit_bytes=vmem_limit,
        ),
    )(tgt_b.astype(bf16), mem_b.astype(bf16), pos_b.astype(bf16), *weights)
    return out


def trdecoder_forward_batch_first(tgt_b, mem_b, pos_b, params, block_b=None):
    """Batch-first (B, P, D) entry point (skips seq-first HBM transposes).
    Returns (B, P, reduced_dim), matching the module output layout."""
    B, P, D = tgt_b.shape
    H = params["l1_w"].shape[0]
    R = params["f1_w"].shape[0]
    Rpad = _round_up(R, 128)
    cap = _vmem_capacity_bytes()
    if block_b is None or B % block_b != 0:
        block_b = _pick_block_b(B, P, D, H, R, Rpad,
                                vmem_budget=int(0.55 * cap),
                                multicore=_is_multicore_chip())
    return _trdecoder_impl(tgt_b, mem_b, pos_b, params,
                           block_b=block_b, vmem_limit=int(0.75 * cap))


def trdecoder_forward(tgt, memory, pos, params, block_b=None):
    """Seq-first (P, B, D) interface (PyTorch nn.MultiheadAttention convention)."""
    tgt_b = jnp.transpose(tgt, (1, 0, 2))
    mem_b = jnp.transpose(memory, (1, 0, 2))
    pos_b = jnp.transpose(pos, (1, 0, 2))
    return trdecoder_forward_batch_first(tgt_b, mem_b, pos_b, params, block_b)


# ----------------------------------------------------------------------------
# Pure-JAX f32 reference (matches the PyTorch module in eval mode).
# ----------------------------------------------------------------------------
def trdecoder_reference(tgt, memory, pos, params):
    P, B, D = tgt.shape

    def ln(x, g, b):
        mu = jnp.mean(x, axis=-1, keepdims=True)
        var = jnp.mean((x - mu) ** 2, axis=-1, keepdims=True)
        return (x - mu) / jnp.sqrt(var + 1e-5) * g + b

    def mha(q_in, k_in, v_in, w, b, ow, ob):
        wq, wk, wv = w[0:D], w[D:2 * D], w[2 * D:3 * D]
        q = q_in @ wq.T + b[0]
        k = k_in @ wk.T + b[1]
        v = v_in @ wv.T + b[2]
        s = jnp.einsum("bqd,bkd->bqk", q, k) / math.sqrt(D)
        p = jax.nn.softmax(s, axis=-1)
        o = jnp.einsum("bqk,bkd->bqd", p, v)
        return o @ ow.T + ob

    x = jnp.transpose(tgt, (1, 0, 2))
    m = jnp.transpose(memory, (1, 0, 2))
    ps = jnp.transpose(pos, (1, 0, 2))
    t2 = mha(x + ps, x + ps, x, params["sa_in_w"], params["sa_in_b"],
             params["sa_out_w"], params["sa_out_b"])
    x = ln(x + t2, params["n1_g"], params["n1_b"])
    t2 = mha(x + ps, m, m, params["ca_in_w"], params["ca_in_b"],
             params["ca_out_w"], params["ca_out_b"])
    x = ln(x + t2, params["n2_g"], params["n2_b"])
    h = jax.nn.relu(x @ params["l1_w"].T + params["l1_b"])
    t2 = h @ params["l2_w"].T + params["l2_b"]
    x = m + ln(x + t2, params["n3_g"], params["n3_b"])
    y1 = x @ params["f1_w"].T + params["f1_b"]
    y2 = jax.nn.relu(x @ params["f2a_w"].T + params["f2a_b"])
    y2 = y2 @ params["f2b_w"].T + params["f2b_b"]
    return y1 + y2


# ----------------------------------------------------------------------------
# Deterministic parameter init (PyTorch-convention shapes, f32).
# ----------------------------------------------------------------------------
def init_params(key, dim, reduced_dim, hidden_dim):
    keys = jax.random.split(key, 16)
    s = 0.02

    def w(k, shape):
        return jax.random.normal(k, shape, jnp.float32) * s

    return {
        "sa_in_w": w(keys[0], (3 * dim, dim)),
        "sa_in_b": jnp.zeros((3, dim), jnp.float32),
        "sa_out_w": w(keys[1], (dim, dim)),
        "sa_out_b": jnp.zeros((1, dim), jnp.float32),
        "ca_in_w": w(keys[2], (3 * dim, dim)),
        "ca_in_b": jnp.zeros((3, dim), jnp.float32),
        "ca_out_w": w(keys[3], (dim, dim)),
        "ca_out_b": jnp.zeros((1, dim), jnp.float32),
        "l1_w": w(keys[4], (hidden_dim, dim)),
        "l1_b": jnp.zeros((1, hidden_dim), jnp.float32),
        "l2_w": w(keys[5], (dim, hidden_dim)),
        "l2_b": jnp.zeros((1, dim), jnp.float32),
        "n1_g": jnp.ones((1, dim), jnp.float32),
        "n1_b": jnp.zeros((1, dim), jnp.float32),
        "n2_g": jnp.ones((1, dim), jnp.float32),
        "n2_b": jnp.zeros((1, dim), jnp.float32),
        "n3_g": jnp.ones((1, dim), jnp.float32),
        "n3_b": jnp.zeros((1, dim), jnp.float32),
        "f1_w": w(keys[6], (reduced_dim, dim)),      # 1x1 conv (R, D, 1, 1) squeezed
        "f1_b": jnp.zeros((1, reduced_dim), jnp.float32),
        "f2a_w": w(keys[7], (dim, dim)),
        "f2a_b": jnp.zeros((1, dim), jnp.float32),
        "f2b_w": w(keys[8], (reduced_dim, dim)),
        "f2b_b": jnp.zeros((1, reduced_dim), jnp.float32),
    }


if __name__ == "__main__":
    # Small shapes: P must be a perfect square (transform needs sqrt(P)); P % 8 == 0
    # keeps in-kernel (Bt,P,D)<->(N,D) reshapes layout-preserving.
    B, P, D = 2, 16, 32          # batch, tokens (= 4x4 spatial), dim
    HIDDEN, REDUCED = 64, 8

    key = jax.random.PRNGKey(0)
    kp, kt, km, kpos = jax.random.split(key, 4)
    params = init_params(kp, D, REDUCED, HIDDEN)

    tgt = jax.random.normal(kt, (P, B, D), jnp.float32)      # seq-first like PyTorch
    memory = jax.random.normal(km, (P, B, D), jnp.float32)
    pos = jax.random.normal(kpos, (P, B, D), jnp.float32)

    out = trdecoder_forward(tgt, memory, pos, params)
    out = jax.block_until_ready(out)

    ref = trdecoder_reference(tgt, memory, pos, params)
    assert out.shape == (B, P, REDUCED), out.shape
    max_err = float(jnp.max(jnp.abs(out - ref)))
    # bf16 MXU operands / bf16-streamed activations -> loose f32 tolerance.
    assert jnp.allclose(out, ref, atol=2e-2, rtol=2e-2), max_err

    print("KERNEL_OK")
</pallas_src>

<mosaic_0001>
module attributes {stable_mosaic.version = 11 : i64} {
  func.func @kernel(%arg0: i32, %arg1: memref<2x16x32xbf16, #tpu.memory_space<vmem>>, %arg2: memref<2x16x32xbf16, #tpu.memory_space<vmem>>, %arg3: memref<2x16x32xbf16, #tpu.memory_space<vmem>>, %arg4: memref<32x32xbf16, #tpu.memory_space<vmem>>, %arg5: memref<32x32xbf16, #tpu.memory_space<vmem>>, %arg6: memref<32x32xbf16, #tpu.memory_space<vmem>>, %arg7: memref<32x32xbf16, #tpu.memory_space<vmem>>, %arg8: memref<32x32xbf16, #tpu.memory_space<vmem>>, %arg9: memref<32x32xbf16, #tpu.memory_space<vmem>>, %arg10: memref<32x32xbf16, #tpu.memory_space<vmem>>, %arg11: memref<32x32xbf16, #tpu.memory_space<vmem>>, %arg12: memref<32x64xbf16, #tpu.memory_space<vmem>>, %arg13: memref<1x64xf32, #tpu.memory_space<vmem>>, %arg14: memref<64x32xbf16, #tpu.memory_space<vmem>>, %arg15: memref<32x160xbf16, #tpu.memory_space<vmem>>, %arg16: memref<1x160xf32, #tpu.memory_space<vmem>>, %arg17: memref<32x128xbf16, #tpu.memory_space<vmem>>, %arg18: memref<1x128xf32, #tpu.memory_space<vmem>>, %arg19: memref<16x32xf32, #tpu.memory_space<vmem>>, %arg20: memref<2x16x8xf32, #tpu.memory_space<vmem>>) attributes {dimension_semantics = [#tpu.dimension_semantics<parallel>], iteration_bounds = array<i64: 1>, scalar_prefetch = 0 : i64, scratch_operands = 0 : i64, tpu.core_type = #tpu.core_type<tc>, window_params = [{transform_indices = @transform_0, window_bounds = array<i64: 2, 16, 32>}, {transform_indices = @transform_1, window_bounds = array<i64: 2, 16, 32>}, {transform_indices = @transform_2, window_bounds = array<i64: 2, 16, 32>}, {pipeline_mode = #tpu.pipeline_mode<synchronous>, transform_indices = @transform_3, window_bounds = array<i64: 32, 32>}, {pipeline_mode = #tpu.pipeline_mode<synchronous>, transform_indices = @transform_4, window_bounds = array<i64: 32, 32>}, {pipeline_mode = #tpu.pipeline_mode<synchronous>, transform_indices = @transform_5, window_bounds = array<i64: 32, 32>}, {pipeline_mode = #tpu.pipeline_mode<synchronous>, transform_indices = @transform_6, window_bounds = array<i64: 32, 32>}, {pipeline_mode = #tpu.pipeline_mode<synchronous>, transform_indices = @transform_7, window_bounds = array<i64: 32, 32>}, {pipeline_mode = #tpu.pipeline_mode<synchronous>, transform_indices = @transform_8, window_bounds = array<i64: 32, 32>}, {pipeline_mode = #tpu.pipeline_mode<synchronous>, transform_indices = @transform_9, window_bounds = array<i64: 32, 32>}, {pipeline_mode = #tpu.pipeline_mode<synchronous>, transform_indices = @transform_10, window_bounds = array<i64: 32, 32>}, {pipeline_mode = #tpu.pipeline_mode<synchronous>, transform_indices = @transform_11, window_bounds = array<i64: 32, 64>}, {pipeline_mode = #tpu.pipeline_mode<synchronous>, transform_indices = @transform_12, window_bounds = array<i64: 1, 64>}, {pipeline_mode = #tpu.pipeline_mode<synchronous>, transform_indices = @transform_13, window_bounds = array<i64: 64, 32>}, {pipeline_mode = #tpu.pipeline_mode<synchronous>, transform_indices = @transform_14, window_bounds = array<i64: 32, 160>}, {pipeline_mode = #tpu.pipeline_mode<synchronous>, transform_indices = @transform_15, window_bounds = array<i64: 1, 160>}, {pipeline_mode = #tpu.pipeline_mode<synchronous>, transform_indices = @transform_16, window_bounds = array<i64: 32, 128>}, {pipeline_mode = #tpu.pipeline_mode<synchronous>, transform_indices = @transform_17, window_bounds = array<i64: 1, 128>}, {pipeline_mode = #tpu.pipeline_mode<synchronous>, transform_indices = @transform_18, window_bounds = array<i64: 16, 32>}, {transform_indices = @transform_19, window_bounds = array<i64: 2, 16, 8>}]} {
    %c0 = arith.constant 0 : index
    %c0_0 = arith.constant 0 : index
    %c0_1 = arith.constant 0 : index
    %0 = vector.load %arg1[%c0, %c0_0, %c0_1] : memref<2x16x32xbf16, #tpu.memory_space<vmem>>, vector<2x16x32xbf16>
    %1 = arith.extf %0 : vector<2x16x32xbf16> to vector<2x16x32xf32>
    %c0_2 = arith.constant 0 : index
    %c0_3 = arith.constant 0 : index
    %c0_4 = arith.constant 0 : index
    %2 = vector.load %arg2[%c0_2, %c0_3, %c0_4] : memref<2x16x32xbf16, #tpu.memory_space<vmem>>, vector<2x16x32xbf16>
    %3 = arith.extf %2 : vector<2x16x32xbf16> to vector<2x16x32xf32>
    %c0_5 = arith.constant 0 : index
    %c0_6 = arith.constant 0 : index
    %c0_7 = arith.constant 0 : index
    %4 = vector.load %arg3[%c0_5, %c0_6, %c0_7] : memref<2x16x32xbf16, #tpu.memory_space<vmem>>, vector<2x16x32xbf16>
    %5 = arith.extf %4 : vector<2x16x32xbf16> to vector<2x16x32xf32>
    %c0_8 = arith.constant 0 : index
    %c0_9 = arith.constant 0 : index
    %6 = vector.load %arg19[%c0_8, %c0_9] : memref<16x32xf32, #tpu.memory_space<vmem>>, vector<16x32xf32>
    %7 = arith.addf %1, %5 : vector<2x16x32xf32>
    %8 = vector.shape_cast %7 : vector<2x16x32xf32> to vector<32x32xf32>
    %9 = arith.truncf %8 : vector<32x32xf32> to vector<32x32xbf16>
    %c0_10 = arith.constant 0 : index
    %c0_11 = arith.constant 0 : index
    %10 = vector.load %arg4[%c0_10, %c0_11] : memref<32x32xbf16, #tpu.memory_space<vmem>>, vector<32x32xbf16>
    %cst = arith.constant dense<0.000000e+00> : vector<32x32xf32>
    %11 = tpu.matmul %9, %10, %cst {dimension_numbers = #tpu.dot_dimension_numbers<[1], [0], [0], [1], [0, 0, 1, 1], [], []>} : vector<32x32xbf16>, vector<32x32xbf16>, vector<32x32xf32> -> vector<32x32xf32>
    %12 = vector.extract_strided_slice %6 {offsets = [0, 0], sizes = [1, 32], strides = [1, 1]} : vector<16x32xf32> to vector<1x32xf32>
    %13 = vector.broadcast %12 : vector<1x32xf32> to vector<32x32xf32>
    %14 = arith.addf %11, %13 : vector<32x32xf32>
    %15 = arith.truncf %8 : vector<32x32xf32> to vector<32x32xbf16>
    %c0_12 = arith.constant 0 : index
    %c0_13 = arith.constant 0 : index
    %16 = vector.load %arg5[%c0_12, %c0_13] : memref<32x32xbf16, #tpu.memory_space<vmem>>, vector<32x32xbf16>
    %cst_14 = arith.constant dense<0.000000e+00> : vector<32x32xf32>
    %17 = tpu.matmul %15, %16, %cst_14 {dimension_numbers = #tpu.dot_dimension_numbers<[1], [0], [0], [1], [0, 0, 1, 1], [], []>} : vector<32x32xbf16>, vector<32x32xbf16>, vector<32x32xf32> -> vector<32x32xf32>
    %18 = vector.extract_strided_slice %6 {offsets = [1, 0], sizes = [1, 32], strides = [1, 1]} : vector<16x32xf32> to vector<1x32xf32>
    %19 = vector.broadcast %18 : vector<1x32xf32> to vector<32x32xf32>
    %20 = arith.addf %17, %19 : vector<32x32xf32>
    %21 = vector.shape_cast %1 : vector<2x16x32xf32> to vector<32x32xf32>
    %22 = arith.truncf %21 : vector<32x32xf32> to vector<32x32xbf16>
    %c0_15 = arith.constant 0 : index
    %c0_16 = arith.constant 0 : index
    %23 = vector.load %arg6[%c0_15, %c0_16] : memref<32x32xbf16, #tpu.memory_space<vmem>>, vector<32x32xbf16>
    %cst_17 = arith.constant dense<0.000000e+00> : vector<32x32xf32>
    %24 = tpu.matmul %22, %23, %cst_17 {dimension_numbers = #tpu.dot_dimension_numbers<[1], [0], [0], [1], [0, 0, 1, 1], [], []>} : vector<32x32xbf16>, vector<32x32xbf16>, vector<32x32xf32> -> vector<32x32xf32>
    %25 = vector.extract_strided_slice %6 {offsets = [2, 0], sizes = [1, 32], strides = [1, 1]} : vector<16x32xf32> to vector<1x32xf32>
    %26 = vector.broadcast %25 : vector<1x32xf32> to vector<32x32xf32>
    %27 = arith.addf %24, %26 : vector<32x32xf32>
    %28 = vector.shape_cast %14 : vector<32x32xf32> to vector<2x16x32xf32>
    %29 = vector.shape_cast %20 : vector<32x32xf32> to vector<2x16x32xf32>
    %30 = vector.shape_cast %27 : vector<32x32xf32> to vector<2x16x32xf32>
    %31 = arith.truncf %28 : vector<2x16x32xf32> to vector<2x16x32xbf16>
    %32 = arith.truncf %29 : vector<2x16x32xf32> to vector<2x16x32xbf16>
    "tpu.trace_start"() <{level = 10 : i32, message = "bqd,bkd->bqk"}> : () -> ()
    %cst_18 = arith.constant dense<0.000000e+00> : vector<2x16x16xf32>
    %33 = tpu.matmul %31, %32, %cst_18 {dimension_numbers = #tpu.dot_dimension_numbers<[2], [2], [1], [1], [0, 0, 0, 1, 1, 1], [0], [0]>} : vector<2x16x32xbf16>, vector<2x16x32xbf16>, vector<2x16x16xf32> -> vector<2x16x16xf32>
    "tpu.trace_stop"() : () -> ()
    %cst_19 = arith.constant dense<0xFF800000> : vector<2x16xf32>
    %34 = vector.multi_reduction <maximumf>, %33, %cst_19 [2] : vector<2x16x16xf32> to vector<2x16xf32>
    %35 = vector.shape_cast %34 : vector<2x16xf32> to vector<2x16x1xf32>
    %36 = vector.broadcast %35 : vector<2x16x1xf32> to vector<2x16x16xf32>
    %37 = arith.subf %33, %36 : vector<2x16x16xf32>
    %38 = math.exp %37 : vector<2x16x16xf32>
    %cst_20 = arith.constant dense<0.000000e+00> : vector<2x16xf32>
    %39 = vector.multi_reduction <add>, %38, %cst_20 [2] : vector<2x16x16xf32> to vector<2x16xf32>
    %40 = vector.shape_cast %39 : vector<2x16xf32> to vector<2x16x1xf32>
    %cst_21 = arith.constant 1.000000e+00 : f32
    %41 = vector.broadcast %cst_21 : f32 to vector<2x16x1xf32>
    %42 = arith.divf %41, %40 : vector<2x16x1xf32>
    %43 = vector.broadcast %42 : vector<2x16x1xf32> to vector<2x16x16xf32>
    %44 = arith.mulf %38, %43 : vector<2x16x16xf32>
    %45 = arith.truncf %44 : vector<2x16x16xf32> to vector<2x16x16xbf16>
    %46 = arith.truncf %30 : vector<2x16x32xf32> to vector<2x16x32xbf16>
    "tpu.trace_start"() <{level = 10 : i32, message = "bqk,bkd->bqd"}> : () -> ()
    %cst_22 = arith.constant dense<0.000000e+00> : vector<2x16x32xf32>
    %47 = tpu.matmul %45, %46, %cst_22 {dimension_numbers = #tpu.dot_dimension_numbers<[2], [1], [1], [2], [0, 0, 0, 1, 1, 2], [0], [0]>} : vector<2x16x16xbf16>, vector<2x16x32xbf16>, vector<2x16x32xf32> -> vector<2x16x32xf32>
    "tpu.trace_stop"() : () -> ()
    %48 = vector.shape_cast %47 : vector<2x16x32xf32> to vector<32x32xf32>
    %49 = arith.truncf %48 : vector<32x32xf32> to vector<32x32xbf16>
    %c0_23 = arith.constant 0 : index
    %c0_24 = arith.constant 0 : index
    %50 = vector.load %arg7[%c0_23, %c0_24] : memref<32x32xbf16, #tpu.memory_space<vmem>>, vector<32x32xbf16>
    %cst_25 = arith.constant dense<0.000000e+00> : vector<32x32xf32>
    %51 = tpu.matmul %49, %50, %cst_25 {dimension_numbers = #tpu.dot_dimension_numbers<[1], [0], [0], [1], [0, 0, 1, 1], [], []>} : vector<32x32xbf16>, vector<32x32xbf16>, vector<32x32xf32> -> vector<32x32xf32>
    %52 = vector.extract_strided_slice %6 {offsets = [3, 0], sizes = [1, 32], strides = [1, 1]} : vector<16x32xf32> to vector<1x32xf32>
    %53 = vector.broadcast %52 : vector<1x32xf32> to vector<32x32xf32>
    %54 = arith.addf %51, %53 : vector<32x32xf32>
    %55 = vector.shape_cast %54 : vector<32x32xf32> to vector<2x16x32xf32>
    %56 = arith.addf %1, %55 : vector<2x16x32xf32>
    %57 = vector.extract_strided_slice %6 {offsets = [9, 0], sizes = [1, 32], strides = [1, 1]} : vector<16x32xf32> to vector<1x32xf32>
    %58 = vector.extract_strided_slice %6 {offsets = [10, 0], sizes = [1, 32], strides = [1, 1]} : vector<16x32xf32> to vector<1x32xf32>
    %cst_26 = arith.constant dense<0.000000e+00> : vector<2x16xf32>
    %59 = vector.multi_reduction <add>, %56, %cst_26 [2] : vector<2x16x32xf32> to vector<2x16xf32>
    %60 = vector.shape_cast %59 : vector<2x16xf32> to vector<2x16x1xf32>
    %cst_27 = arith.constant 3.200000e+01 : f32
    %61 = vector.broadcast %cst_27 : f32 to vector<2x16x1xf32>
    %62 = arith.divf %60, %61 : vector<2x16x1xf32>
    %63 = vector.broadcast %62 : vector<2x16x1xf32> to vector<2x16x32xf32>
    %64 = arith.subf %56, %63 : vector<2x16x32xf32>
    %65 = arith.mulf %64, %64 : vector<2x16x32xf32>
    %cst_28 = arith.constant dense<0.000000e+00> : vector<2x16xf32>
    %66 = vector.multi_reduction <add>, %65, %cst_28 [2] : vector<2x16x32xf32> to vector<2x16xf32>
    %67 = vector.shape_cast %66 : vector<2x16xf32> to vector<2x16x1xf32>
    %cst_29 = arith.constant 3.200000e+01 : f32
    %68 = vector.broadcast %cst_29 : f32 to vector<2x16x1xf32>
    %69 = arith.divf %67, %68 : vector<2x16x1xf32>
    %cst_30 = arith.constant 9.99999974E-6 : f32
    %70 = vector.broadcast %cst_30 : f32 to vector<2x16x1xf32>
    %71 = arith.addf %69, %70 : vector<2x16x1xf32>
    %72 = math.rsqrt %71 : vector<2x16x1xf32>
    %73 = vector.broadcast %72 : vector<2x16x1xf32> to vector<2x16x32xf32>
    %74 = arith.mulf %64, %73 : vector<2x16x32xf32>
    %75 = vector.shape_cast %57 : vector<1x32xf32> to vector<1x1x32xf32>
    %76 = vector.broadcast %75 : vector<1x1x32xf32> to vector<2x16x32xf32>
    %77 = arith.mulf %74, %76 : vector<2x16x32xf32>
    %78 = vector.shape_cast %58 : vector<1x32xf32> to vector<1x1x32xf32>
    %79 = vector.broadcast %78 : vector<1x1x32xf32> to vector<2x16x32xf32>
    %80 = arith.addf %77, %79 : vector<2x16x32xf32>
    %81 = arith.addf %80, %5 : vector<2x16x32xf32>
    %82 = vector.shape_cast %81 : vector<2x16x32xf32> to vector<32x32xf32>
    %83 = arith.truncf %82 : vector<32x32xf32> to vector<32x32xbf16>
    %c0_31 = arith.constant 0 : index
    %c0_32 = arith.constant 0 : index
    %84 = vector.load %arg8[%c0_31, %c0_32] : memref<32x32xbf16, #tpu.memory_space<vmem>>, vector<32x32xbf16>
    %cst_33 = arith.constant dense<0.000000e+00> : vector<32x32xf32>
    %85 = tpu.matmul %83, %84, %cst_33 {dimension_numbers = #tpu.dot_dimension_numbers<[1], [0], [0], [1], [0, 0, 1, 1], [], []>} : vector<32x32xbf16>, vector<32x32xbf16>, vector<32x32xf32> -> vector<32x32xf32>
    %86 = vector.extract_strided_slice %6 {offsets = [4, 0], sizes = [1, 32], strides = [1, 1]} : vector<16x32xf32> to vector<1x32xf32>
    %87 = vector.broadcast %86 : vector<1x32xf32> to vector<32x32xf32>
    %88 = arith.addf %85, %87 : vector<32x32xf32>
    %89 = vector.shape_cast %3 : vector<2x16x32xf32> to vector<32x32xf32>
    %90 = arith.truncf %89 : vector<32x32xf32> to vector<32x32xbf16>
    %c0_34 = arith.constant 0 : index
    %c0_35 = arith.constant 0 : index
    %91 = vector.load %arg9[%c0_34, %c0_35] : memref<32x32xbf16, #tpu.memory_space<vmem>>, vector<32x32xbf16>
    %cst_36 = arith.constant dense<0.000000e+00> : vector<32x32xf32>
    %92 = tpu.matmul %90, %91, %cst_36 {dimension_numbers = #tpu.dot_dimension_numbers<[1], [0], [0], [1], [0, 0, 1, 1], [], []>} : vector<32x32xbf16>, vector<32x32xbf16>, vector<32x32xf32> -> vector<32x32xf32>
    %93 = vector.extract_strided_slice %6 {offsets = [5, 0], sizes = [1, 32], strides = [1, 1]} : vector<16x32xf32> to vector<1x32xf32>
    %94 = vector.broadcast %93 : vector<1x32xf32> to vector<32x32xf32>
    %95 = arith.addf %92, %94 : vector<32x32xf32>
    %96 = arith.truncf %89 : vector<32x32xf32> to vector<32x32xbf16>
    %c0_37 = arith.constant 0 : index
    %c0_38 = arith.constant 0 : index
    %97 = vector.load %arg10[%c0_37, %c0_38] : memref<32x32xbf16, #tpu.memory_space<vmem>>, vector<32x32xbf16>
    %cst_39 = arith.constant dense<0.000000e+00> : vector<32x32xf32>
    %98 = tpu.matmul %96, %97, %cst_39 {dimension_numbers = #tpu.dot_dimension_numbers<[1], [0], [0], [1], [0, 0, 1, 1], [], []>} : vector<32x32xbf16>, vector<32x32xbf16>, vector<32x32xf32> -> vector<32x32xf32>
    %99 = vector.extract_strided_slice %6 {offsets = [6, 0], sizes = [1, 32], strides = [1, 1]} : vector<16x32xf32> to vector<1x32xf32>
    %100 = vector.broadcast %99 : vector<1x32xf32> to vector<32x32xf32>
    %101 = arith.addf %98, %100 : vector<32x32xf32>
    %102 = vector.shape_cast %88 : vector<32x32xf32> to vector<2x16x32xf32>
    %103 = vector.shape_cast %95 : vector<32x32xf32> to vector<2x16x32xf32>
    %104 = vector.shape_cast %101 : vector<32x32xf32> to vector<2x16x32xf32>
    %105 = arith.truncf %102 : vector<2x16x32xf32> to vector<2x16x32xbf16>
    %106 = arith.truncf %103 : vector<2x16x32xf32> to vector<2x16x32xbf16>
    "tpu.trace_start"() <{level = 10 : i32, message = "bqd,bkd->bqk"}> : () -> ()
    %cst_40 = arith.constant dense<0.000000e+00> : vector<2x16x16xf32>
    %107 = tpu.matmul %105, %106, %cst_40 {dimension_numbers = #tpu.dot_dimension_numbers<[2], [2], [1], [1], [0, 0, 0, 1, 1, 1], [0], [0]>} : vector<2x16x32xbf16>, vector<2x16x32xbf16>, vector<2x16x16xf32> -> vector<2x16x16xf32>
    "tpu.trace_stop"() : () -> ()
    %cst_41 = arith.constant dense<0xFF800000> : vector<2x16xf32>
    %108 = vector.multi_reduction <maximumf>, %107, %cst_41 [2] : vector<2x16x16xf32> to vector<2x16xf32>
    %109 = vector.shape_cast %108 : vector<2x16xf32> to vector<2x16x1xf32>
    %110 = vector.broadcast %109 : vector<2x16x1xf32> to vector<2x16x16xf32>
    %111 = arith.subf %107, %110 : vector<2x16x16xf32>
    %112 = math.exp %111 : vector<2x16x16xf32>
    %cst_42 = arith.constant dense<0.000000e+00> : vector<2x16xf32>
    %113 = vector.multi_reduction <add>, %112, %cst_42 [2] : vector<2x16x16xf32> to vector<2x16xf32>
    %114 = vector.shape_cast %113 : vector<2x16xf32> to vector<2x16x1xf32>
    %cst_43 = arith.constant 1.000000e+00 : f32
    %115 = vector.broadcast %cst_43 : f32 to vector<2x16x1xf32>
    %116 = arith.divf %115, %114 : vector<2x16x1xf32>
    %117 = vector.broadcast %116 : vector<2x16x1xf32> to vector<2x16x16xf32>
    %118 = arith.mulf %112, %117 : vector<2x16x16xf32>
    %119 = arith.truncf %118 : vector<2x16x16xf32> to vector<2x16x16xbf16>
    %120 = arith.truncf %104 : vector<2x16x32xf32> to vector<2x16x32xbf16>
    "tpu.trace_start"() <{level = 10 : i32, message = "bqk,bkd->bqd"}> : () -> ()
    %cst_44 = arith.constant dense<0.000000e+00> : vector<2x16x32xf32>
    %121 = tpu.matmul %119, %120, %cst_44 {dimension_numbers = #tpu.dot_dimension_numbers<[2], [1], [1], [2], [0, 0, 0, 1, 1, 2], [0], [0]>} : vector<2x16x16xbf16>, vector<2x16x32xbf16>, vector<2x16x32xf32> -> vector<2x16x32xf32>
    "tpu.trace_stop"() : () -> ()
    %122 = vector.shape_cast %121 : vector<2x16x32xf32> to vector<32x32xf32>
    %123 = arith.truncf %122 : vector<32x32xf32> to vector<32x32xbf16>
    %c0_45 = arith.constant 0 : index
    %c0_46 = arith.constant 0 : index
    %124 = vector.load %arg11[%c0_45, %c0_46] : memref<32x32xbf16, #tpu.memory_space<vmem>>, vector<32x32xbf16>
    %cst_47 = arith.constant dense<0.000000e+00> : vector<32x32xf32>
    %125 = tpu.matmul %123, %124, %cst_47 {dimension_numbers = #tpu.dot_dimension_numbers<[1], [0], [0], [1], [0, 0, 1, 1], [], []>} : vector<32x32xbf16>, vector<32x32xbf16>, vector<32x32xf32> -> vector<32x32xf32>
    %126 = vector.extract_strided_slice %6 {offsets = [7, 0], sizes = [1, 32], strides = [1, 1]} : vector<16x32xf32> to vector<1x32xf32>
    %127 = vector.broadcast %126 : vector<1x32xf32> to vector<32x32xf32>
    %128 = arith.addf %125, %127 : vector<32x32xf32>
    %129 = vector.shape_cast %128 : vector<32x32xf32> to vector<2x16x32xf32>
    %130 = arith.addf %80, %129 : vector<2x16x32xf32>
    %131 = vector.extract_strided_slice %6 {offsets = [11, 0], sizes = [1, 32], strides = [1, 1]} : vector<16x32xf32> to vector<1x32xf32>
    %132 = vector.extract_strided_slice %6 {offsets = [12, 0], sizes = [1, 32], strides = [1, 1]} : vector<16x32xf32> to vector<1x32xf32>
    %cst_48 = arith.constant dense<0.000000e+00> : vector<2x16xf32>
    %133 = vector.multi_reduction <add>, %130, %cst_48 [2] : vector<2x16x32xf32> to vector<2x16xf32>
    %134 = vector.shape_cast %133 : vector<2x16xf32> to vector<2x16x1xf32>
    %cst_49 = arith.constant 3.200000e+01 : f32
    %135 = vector.broadcast %cst_49 : f32 to vector<2x16x1xf32>
    %136 = arith.divf %134, %135 : vector<2x16x1xf32>
    %137 = vector.broadcast %136 : vector<2x16x1xf32> to vector<2x16x32xf32>
    %138 = arith.subf %130, %137 : vector<2x16x32xf32>
    %139 = arith.mulf %138, %138 : vector<2x16x32xf32>
    %cst_50 = arith.constant dense<0.000000e+00> : vector<2x16xf32>
    %140 = vector.multi_reduction <add>, %139, %cst_50 [2] : vector<2x16x32xf32> to vector<2x16xf32>
    %141 = vector.shape_cast %140 : vector<2x16xf32> to vector<2x16x1xf32>
    %cst_51 = arith.constant 3.200000e+01 : f32
    %142 = vector.broadcast %cst_51 : f32 to vector<2x16x1xf32>
    %143 = arith.divf %141, %142 : vector<2x16x1xf32>
    %cst_52 = arith.constant 9.99999974E-6 : f32
    %144 = vector.broadcast %cst_52 : f32 to vector<2x16x1xf32>
    %145 = arith.addf %143, %144 : vector<2x16x1xf32>
    %146 = math.rsqrt %145 : vector<2x16x1xf32>
    %147 = vector.broadcast %146 : vector<2x16x1xf32> to vector<2x16x32xf32>
    %148 = arith.mulf %138, %147 : vector<2x16x32xf32>
    %149 = vector.shape_cast %131 : vector<1x32xf32> to vector<1x1x32xf32>
    %150 = vector.broadcast %149 : vector<1x1x32xf32> to vector<2x16x32xf32>
    %151 = arith.mulf %148, %150 : vector<2x16x32xf32>
    %152 = vector.shape_cast %132 : vector<1x32xf32> to vector<1x1x32xf32>
    %153 = vector.broadcast %152 : vector<1x1x32xf32> to vector<2x16x32xf32>
    %154 = arith.addf %151, %153 : vector<2x16x32xf32>
    %155 = vector.shape_cast %154 : vector<2x16x32xf32> to vector<32x32xf32>
    %c0_53 = arith.constant 0 : index
    %c0_54 = arith.constant 0 : index
    %156 = vector.load %arg13[%c0_53, %c0_54] : memref<1x64xf32, #tpu.memory_space<vmem>>, vector<1x64xf32>
    %157 = arith.truncf %155 : vector<32x32xf32> to vector<32x32xbf16>
    %c0_55 = arith.constant 0 : index
    %c0_56 = arith.constant 0 : index
    %158 = vector.load %arg12[%c0_55, %c0_56] : memref<32x64xbf16, #tpu.memory_space<vmem>>, vector<32x64xbf16>
    %cst_57 = arith.constant dense<0.000000e+00> : vector<32x64xf32>
    %159 = tpu.matmul %157, %158, %cst_57 {dimension_numbers = #tpu.dot_dimension_numbers<[1], [0], [0], [1], [0, 0, 1, 1], [], []>} : vector<32x32xbf16>, vector<32x64xbf16>, vector<32x64xf32> -> vector<32x64xf32>
    %160 = vector.broadcast %156 : vector<1x64xf32> to vector<32x64xf32>
    %161 = arith.addf %159, %160 : vector<32x64xf32>
    %cst_58 = arith.constant 0.000000e+00 : f32
    %162 = vector.broadcast %cst_58 : f32 to vector<32x64xf32>
    %163 = arith.maximumf %161, %162 : vector<32x64xf32>
    %164 = arith.truncf %163 : vector<32x64xf32> to vector<32x64xbf16>
    %c0_59 = arith.constant 0 : index
    %c0_60 = arith.constant 0 : index
    %165 = vector.load %arg14[%c0_59, %c0_60] : memref<64x32xbf16, #tpu.memory_space<vmem>>, vector<64x32xbf16>
    %cst_61 = arith.constant dense<0.000000e+00> : vector<32x32xf32>
    %166 = tpu.matmul %164, %165, %cst_61 {dimension_numbers = #tpu.dot_dimension_numbers<[1], [0], [0], [1], [0, 0, 1, 1], [], []>} : vector<32x64xbf16>, vector<64x32xbf16>, vector<32x32xf32> -> vector<32x32xf32>
    %167 = vector.extract_strided_slice %6 {offsets = [8, 0], sizes = [1, 32], strides = [1, 1]} : vector<16x32xf32> to vector<1x32xf32>
    %168 = vector.broadcast %167 : vector<1x32xf32> to vector<32x32xf32>
    %169 = arith.addf %166, %168 : vector<32x32xf32>
    %170 = vector.shape_cast %169 : vector<32x32xf32> to vector<2x16x32xf32>
    %171 = arith.addf %154, %170 : vector<2x16x32xf32>
    %172 = vector.extract_strided_slice %6 {offsets = [13, 0], sizes = [1, 32], strides = [1, 1]} : vector<16x32xf32> to vector<1x32xf32>
    %173 = vector.extract_strided_slice %6 {offsets = [14, 0], sizes = [1, 32], strides = [1, 1]} : vector<16x32xf32> to vector<1x32xf32>
    %cst_62 = arith.constant dense<0.000000e+00> : vector<2x16xf32>
    %174 = vector.multi_reduction <add>, %171, %cst_62 [2] : vector<2x16x32xf32> to vector<2x16xf32>
    %175 = vector.shape_cast %174 : vector<2x16xf32> to vector<2x16x1xf32>
    %cst_63 = arith.constant 3.200000e+01 : f32
    %176 = vector.broadcast %cst_63 : f32 to vector<2x16x1xf32>
    %177 = arith.divf %175, %176 : vector<2x16x1xf32>
    %178 = vector.broadcast %177 : vector<2x16x1xf32> to vector<2x16x32xf32>
    %179 = arith.subf %171, %178 : vector<2x16x32xf32>
    %180 = arith.mulf %179, %179 : vector<2x16x32xf32>
    %cst_64 = arith.constant dense<0.000000e+00> : vector<2x16xf32>
    %181 = vector.multi_reduction <add>, %180, %cst_64 [2] : vector<2x16x32xf32> to vector<2x16xf32>
    %182 = vector.shape_cast %181 : vector<2x16xf32> to vector<2x16x1xf32>
    %cst_65 = arith.constant 3.200000e+01 : f32
    %183 = vector.broadcast %cst_65 : f32 to vector<2x16x1xf32>
    %184 = arith.divf %182, %183 : vector<2x16x1xf32>
    %cst_66 = arith.constant 9.99999974E-6 : f32
    %185 = vector.broadcast %cst_66 : f32 to vector<2x16x1xf32>
    %186 = arith.addf %184, %185 : vector<2x16x1xf32>
    %187 = math.rsqrt %186 : vector<2x16x1xf32>
    %188 = vector.broadcast %187 : vector<2x16x1xf32> to vector<2x16x32xf32>
    %189 = arith.mulf %179, %188 : vector<2x16x32xf32>
    %190 = vector.shape_cast %172 : vector<1x32xf32> to vector<1x1x32xf32>
    %191 = vector.broadcast %190 : vector<1x1x32xf32> to vector<2x16x32xf32>
    %192 = arith.mulf %189, %191 : vector<2x16x32xf32>
    %193 = vector.shape_cast %173 : vector<1x32xf32> to vector<1x1x32xf32>
    %194 = vector.broadcast %193 : vector<1x1x32xf32> to vector<2x16x32xf32>
    %195 = arith.addf %192, %194 : vector<2x16x32xf32>
    %196 = arith.addf %3, %195 : vector<2x16x32xf32>
    %197 = vector.shape_cast %196 : vector<2x16x32xf32> to vector<32x32xf32>
    %c0_67 = arith.constant 0 : index
    %c0_68 = arith.constant 0 : index
    %198 = vector.load %arg16[%c0_67, %c0_68] : memref<1x160xf32, #tpu.memory_space<vmem>>, vector<1x160xf32>
    %199 = arith.truncf %197 : vector<32x32xf32> to vector<32x32xbf16>
    %c0_69 = arith.constant 0 : index
    %c0_70 = arith.constant 0 : index
    %200 = vector.load %arg15[%c0_69, %c0_70] : memref<32x160xbf16, #tpu.memory_space<vmem>>, vector<32x160xbf16>
    %cst_71 = arith.constant dense<0.000000e+00> : vector<32x160xf32>
    %201 = tpu.matmul %199, %200, %cst_71 {dimension_numbers = #tpu.dot_dimension_numbers<[1], [0], [0], [1], [0, 0, 1, 1], [], []>} : vector<32x32xbf16>, vector<32x160xbf16>, vector<32x160xf32> -> vector<32x160xf32>
    %202 = vector.broadcast %198 : vector<1x160xf32> to vector<32x160xf32>
    %203 = arith.addf %201, %202 : vector<32x160xf32>
    %204 = vector.extract_strided_slice %203 {offsets = [0, 0], sizes = [32, 128], strides = [1, 1]} : vector<32x160xf32> to vector<32x128xf32>
    %205 = vector.extract_strided_slice %203 {offsets = [0, 128], sizes = [32, 32], strides = [1, 1]} : vector<32x160xf32> to vector<32x32xf32>
    %cst_72 = arith.constant 0.000000e+00 : f32
    %206 = vector.broadcast %cst_72 : f32 to vector<32x32xf32>
    %207 = arith.maximumf %205, %206 : vector<32x32xf32>
    %c0_73 = arith.constant 0 : index
    %c0_74 = arith.constant 0 : index
    %208 = vector.load %arg18[%c0_73, %c0_74] : memref<1x128xf32, #tpu.memory_space<vmem>>, vector<1x128xf32>
    %209 = arith.truncf %207 : vector<32x32xf32> to vector<32x32xbf16>
    %c0_75 = arith.constant 0 : index
    %c0_76 = arith.constant 0 : index
    %210 = vector.load %arg17[%c0_75, %c0_76] : memref<32x128xbf16, #tpu.memory_space<vmem>>, vector<32x128xbf16>
    %cst_77 = arith.constant dense<0.000000e+00> : vector<32x128xf32>
    %211 = tpu.matmul %209, %210, %cst_77 {dimension_numbers = #tpu.dot_dimension_numbers<[1], [0], [0], [1], [0, 0, 1, 1], [], []>} : vector<32x32xbf16>, vector<32x128xbf16>, vector<32x128xf32> -> vector<32x128xf32>
    %212 = vector.broadcast %208 : vector<1x128xf32> to vector<32x128xf32>
    %213 = arith.addf %211, %212 : vector<32x128xf32>
    %214 = arith.addf %204, %213 : vector<32x128xf32>
    %215 = vector.extract_strided_slice %214 {offsets = [0, 0], sizes = [32, 8], strides = [1, 1]} : vector<32x128xf32> to vector<32x8xf32>
    %216 = vector.shape_cast %215 : vector<32x8xf32> to vector<2x16x8xf32>
    %c0_78 = arith.constant 0 : index
    %c0_79 = arith.constant 0 : index
    %c0_80 = arith.constant 0 : index
    %217 = vector.load %arg20[%c0_78, %c0_79, %c0_80] : memref<2x16x8xf32, #tpu.memory_space<vmem>>, vector<2x16x8xf32>
    tpu.vector_store %arg20[%c0_78, %c0_79, %c0_80], %216 {strides = array<i32>} : memref<2x16x8xf32, #tpu.memory_space<vmem>>, vector<2x16x8xf32>,
    return
  }
  func.func @transform_0(%arg0: i32) -> (i32, i32, i32) {
    %c0_i32 = arith.constant 0 : i32
    %c0_i32_0 = arith.constant 0 : i32
    %c0_i32_1 = arith.constant 0 : i32
    return %arg0, %c0_i32, %c0_i32_0 : i32, i32, i32
  }
  func.func @transform_1(%arg0: i32) -> (i32, i32, i32) {
    %c0_i32 = arith.constant 0 : i32
    %c0_i32_0 = arith.constant 0 : i32
    %c0_i32_1 = arith.constant 0 : i32
    return %arg0, %c0_i32, %c0_i32_0 : i32, i32, i32
  }
  func.func @transform_2(%arg0: i32) -> (i32, i32, i32) {
    %c0_i32 = arith.constant 0 : i32
    %c0_i32_0 = arith.constant 0 : i32
    %c0_i32_1 = arith.constant 0 : i32
    return %arg0, %c0_i32, %c0_i32_0 : i32, i32, i32
  }
  func.func @transform_3(%arg0: i32) -> (i32, i32) {
    %c0_i32 = arith.constant 0 : i32
    %c0_i32_0 = arith.constant 0 : i32
    %c0_i32_1 = arith.constant 0 : i32
    return %c0_i32, %c0_i32_0 : i32, i32
  }
  func.func @transform_4(%arg0: i32) -> (i32, i32) {
    %c0_i32 = arith.constant 0 : i32
    %c0_i32_0 = arith.constant 0 : i32
    %c0_i32_1 = arith.constant 0 : i32
    return %c0_i32, %c0_i32_0 : i32, i32
  }
  func.func @transform_5(%arg0: i32) -> (i32, i32) {
    %c0_i32 = arith.constant 0 : i32
    %c0_i32_0 = arith.constant 0 : i32
    %c0_i32_1 = arith.constant 0 : i32
    return %c0_i32, %c0_i32_0 : i32, i32
  }
  func.func @transform_6(%arg0: i32) -> (i32, i32) {
    %c0_i32 = arith.constant 0 : i32
    %c0_i32_0 = arith.constant 0 : i32
    %c0_i32_1 = arith.constant 0 : i32
    return %c0_i32, %c0_i32_0 : i32, i32
  }
  func.func @transform_7(%arg0: i32) -> (i32, i32) {
    %c0_i32 = arith.constant 0 : i32
    %c0_i32_0 = arith.constant 0 : i32
    %c0_i32_1 = arith.constant 0 : i32
    return %c0_i32, %c0_i32_0 : i32, i32
  }
  func.func @transform_8(%arg0: i32) -> (i32, i32) {
    %c0_i32 = arith.constant 0 : i32
    %c0_i32_0 = arith.constant 0 : i32
    %c0_i32_1 = arith.constant 0 : i32
    return %c0_i32, %c0_i32_0 : i32, i32
  }
  func.func @transform_9(%arg0: i32) -> (i32, i32) {
    %c0_i32 = arith.constant 0 : i32
    %c0_i32_0 = arith.constant 0 : i32
    %c0_i32_1 = arith.constant 0 : i32
    return %c0_i32, %c0_i32_0 : i32, i32
  }
  func.func @transform_10(%arg0: i32) -> (i32, i32) {
    %c0_i32 = arith.constant 0 : i32
    %c0_i32_0 = arith.constant 0 : i32
    %c0_i32_1 = arith.constant 0 : i32
    return %c0_i32, %c0_i32_0 : i32, i32
  }
  func.func @transform_11(%arg0: i32) -> (i32, i32) {
    %c0_i32 = arith.constant 0 : i32
    %c0_i32_0 = arith.constant 0 : i32
    %c0_i32_1 = arith.constant 0 : i32
    return %c0_i32, %c0_i32_0 : i32, i32
  }
  func.func @transform_12(%arg0: i32) -> (i32, i32) {
    %c0_i32 = arith.constant 0 : i32
    %c0_i32_0 = arith.constant 0 : i32
    %c0_i32_1 = arith.constant 0 : i32
    return %c0_i32, %c0_i32_0 : i32, i32
  }
  func.func @transform_13(%arg0: i32) -> (i32, i32) {
    %c0_i32 = arith.constant 0 : i32
    %c0_i32_0 = arith.constant 0 : i32
    %c0_i32_1 = arith.constant 0 : i32
    return %c0_i32, %c0_i32_0 : i32, i32
  }
  func.func @transform_14(%arg0: i32) -> (i32, i32) {
    %c0_i32 = arith.constant 0 : i32
    %c0_i32_0 = arith.constant 0 : i32
    %c0_i32_1 = arith.constant 0 : i32
    return %c0_i32, %c0_i32_0 : i32, i32
  }
  func.func @transform_15(%arg0: i32) -> (i32, i32) {
    %c0_i32 = arith.constant 0 : i32
    %c0_i32_0 = arith.constant 0 : i32
    %c0_i32_1 = arith.constant 0 : i32
    return %c0_i32, %c0_i32_0 : i32, i32
  }
  func.func @transform_16(%arg0: i32) -> (i32, i32) {
    %c0_i32 = arith.constant 0 : i32
    %c0_i32_0 = arith.constant 0 : i32
    %c0_i32_1 = arith.constant 0 : i32
    return %c0_i32, %c0_i32_0 : i32, i32
  }
  func.func @transform_17(%arg0: i32) -> (i32, i32) {
    %c0_i32 = arith.constant 0 : i32
    %c0_i32_0 = arith.constant 0 : i32
    %c0_i32_1 = arith.constant 0 : i32
    return %c0_i32, %c0_i32_0 : i32, i32
  }
  func.func @transform_18(%arg0: i32) -> (i32, i32) {
    %c0_i32 = arith.constant 0 : i32
    %c0_i32_0 = arith.constant 0 : i32
    %c0_i32_1 = arith.constant 0 : i32
    return %c0_i32, %c0_i32_0 : i32, i32
  }
  func.func @transform_19(%arg0: i32) -> (i32, i32, i32) {
    %c0_i32 = arith.constant 0 : i32
    %c0_i32_0 = arith.constant 0 : i32
    %c0_i32_1 = arith.constant 0 : i32
    return %arg0, %c0_i32, %c0_i32_0 : i32, i32, i32
  }
}

</mosaic_0001>

<llo_original>
// kernel: _trdecoder_impl.1
$region0: #{_trdecoder_impl.1}
  #allocation0 [shape = 'u32[]', space=smem, size = 0x4, offset = 0x4, fixed_abs, tag = 'smem constant byte address 0x4 - core index']
  #allocation1 [shape = 'u32[144,128]{1,0:T(1,128)}', space=vmem, size = 0x12000, scoped, tag = 'internal scratch']
  %s0 = inlined_call_operand.vmem [shape: bf16[2,16,32], index: 0, kind: input, shape index: {}]
  %s1 = inlined_call_operand.vmem [shape: bf16[2,16,32], index: 1, kind: input, shape index: {}]
  %s2 = inlined_call_operand.vmem [shape: bf16[2,16,32], index: 2, kind: input, shape index: {}]
  %s3 = inlined_call_operand.vmem [shape: bf16[32,32], index: 3, kind: input, shape index: {}]
  %s4 = inlined_call_operand.vmem [shape: bf16[32,32], index: 4, kind: input, shape index: {}]
  %s5 = inlined_call_operand.vmem [shape: bf16[32,32], index: 5, kind: input, shape index: {}]
  %s6 = inlined_call_operand.vmem [shape: bf16[32,32], index: 6, kind: input, shape index: {}]
  %s7 = inlined_call_operand.vmem [shape: bf16[32,32], index: 7, kind: input, shape index: {}]
  %s8 = inlined_call_operand.vmem [shape: bf16[32,32], index: 8, kind: input, shape index: {}]
  %s9 = inlined_call_operand.vmem [shape: bf16[32,32], index: 9, kind: input, shape index: {}]
  %s10 = inlined_call_operand.vmem [shape: bf16[32,32], index: 10, kind: input, shape index: {}]
  %s11 = inlined_call_operand.vmem [shape: bf16[32,64], index: 11, kind: input, shape index: {}]
  %s12 = inlined_call_operand.vmem [shape: f32[1,64], index: 12, kind: input, shape index: {}]
  %s13 = inlined_call_operand.vmem [shape: bf16[64,32], index: 13, kind: input, shape index: {}]
  %s14 = inlined_call_operand.vmem [shape: bf16[32,160], index: 14, kind: input, shape index: {}]
  %s15 = inlined_call_operand.vmem [shape: f32[1,160], index: 15, kind: input, shape index: {}]
  %s16 = inlined_call_operand.vmem [shape: bf16[32,128], index: 16, kind: input, shape index: {}]
  %s17 = inlined_call_operand.vmem [shape: f32[1,128], index: 17, kind: input, shape index: {}]
  %s18 = inlined_call_operand.vmem [shape: f32[16,32], index: 18, kind: input, shape index: {}]
  %s19 = inlined_call_operand.vmem [shape: f32[2,16,8], index: 19, kind: output, shape index: {}]
  %s20 = sld [smem:[#allocation0]]
  $region86: #{_trdecoder_impl.1} parent=0
    _
  %s22 = ssub.s32 1, %s20
  %s23 = scalar_select 0, %s22, %s20
  // Predicated region
  $region2: #{_trdecoder_impl.1} parent=0 // pred_check
    _
  $region3: #{_trdecoder_impl.1} parent=0 // pred_check_branch
    %25 = sbr.rel (0) target = $region5
  $region4: #{_trdecoder_impl.1} parent=0 // pred_region
    _
  $region5: #{_trdecoder_impl.1} parent=0 // pred_fallthru
    _
  // Predicated region
  $region6: #{_trdecoder_impl.1} parent=0 // pred_check
    _
  $region7: #{_trdecoder_impl.1} parent=0 // pred_check_branch
    %27 = sbr.rel (0) target = $region9
  $region8: #{_trdecoder_impl.1} parent=0 // pred_region
    _
  $region9: #{_trdecoder_impl.1} parent=0 // pred_fallthru
    _
  // Predicated region
  $region10: #{_trdecoder_impl.1} parent=0 // pred_check
    _
  $region11: #{_trdecoder_impl.1} parent=0 // pred_check_branch
    %29 = sbr.rel (0) target = $region13
  $region12: #{_trdecoder_impl.1} parent=0 // pred_region
    _
  $region13: #{_trdecoder_impl.1} parent=0 // pred_fallthru
    _
  // Predicated region
  $region14: #{_trdecoder_impl.1} parent=0 // pred_check
    _
  $region15: #{_trdecoder_impl.1} parent=0 // pred_check_branch
    %31 = sbr.rel (0) target = $region17
  $region16: #{_trdecoder_impl.1} parent=0 // pred_region
    _
  $region17: #{_trdecoder_impl.1} parent=0 // pred_fallthru
    _
  // Predicated region
  $region18: #{_trdecoder_impl.1} parent=0 // pred_check
    _
  $region19: #{_trdecoder_impl.1} parent=0 // pred_check_branch
    %33 = sbr.rel (0) target = $region21
  $region20: #{_trdecoder_impl.1} parent=0 // pred_region
    _
  $region21: #{_trdecoder_impl.1} parent=0 // pred_fallthru
    _
  // Predicated region
  $region22: #{_trdecoder_impl.1} parent=0 // pred_check
    _
  $region23: #{_trdecoder_impl.1} parent=0 // pred_check_branch
    %35 = sbr.rel (0) target = $region25
  $region24: #{_trdecoder_impl.1} parent=0 // pred_region
    _
  $region25: #{_trdecoder_impl.1} parent=0 // pred_fallthru
    _
  // Predicated region
  $region26: #{_trdecoder_impl.1} parent=0 // pred_check
    _
  $region27: #{_trdecoder_impl.1} parent=0 // pred_check_branch
    %37 = sbr.rel (0) target = $region29
  $region28: #{_trdecoder_impl.1} parent=0 // pred_region
    _
  $region29: #{_trdecoder_impl.1} parent=0 // pred_fallthru
    _
  // Predicated region
  $region30: #{_trdecoder_impl.1} parent=0 // pred_check
    _
  $region31: #{_trdecoder_impl.1} parent=0 // pred_check_branch
    %39 = sbr.rel (0) target = $region33
  $region32: #{_trdecoder_impl.1} parent=0 // pred_region
    _
  $region33: #{_trdecoder_impl.1} parent=0 // pred_fallthru
    _
  // Predicated region
  $region34: #{_trdecoder_impl.1} parent=0 // pred_check
    _
  $region35: #{_trdecoder_impl.1} parent=0 // pred_check_branch
    %41 = sbr.rel (0) target = $region37
  $region36: #{_trdecoder_impl.1} parent=0 // pred_region
    _
  $region37: #{_trdecoder_impl.1} parent=0 // pred_fallthru
    _
  // Predicated region
  $region38: #{_trdecoder_impl.1} parent=0 // pred_check
    _
  $region39: #{_trdecoder_impl.1} parent=0 // pred_check_branch
    %43 = sbr.rel (0) target = $region41
  $region40: #{_trdecoder_impl.1} parent=0 // pred_region
    _
  $region41: #{_trdecoder_impl.1} parent=0 // pred_fallthru
    _
  // Predicated region
  $region42: #{_trdecoder_impl.1} parent=0 // pred_check
    _
  $region43: #{_trdecoder_impl.1} parent=0 // pred_check_branch
    %45 = sbr.rel (0) target = $region45
  $region44: #{_trdecoder_impl.1} parent=0 // pred_region
    _
  $region45: #{_trdecoder_impl.1} parent=0 // pred_fallthru
    _
  // Predicated region
  $region46: #{_trdecoder_impl.1} parent=0 // pred_check
    _
  $region47: #{_trdecoder_impl.1} parent=0 // pred_check_branch
    %47 = sbr.rel (0) target = $region49
  $region48: #{_trdecoder_impl.1} parent=0 // pred_region
    _
  $region49: #{_trdecoder_impl.1} parent=0 // pred_fallthru
    _
  // Predicated region
  $region50: #{_trdecoder_impl.1} parent=0 // pred_check
    _
  $region51: #{_trdecoder_impl.1} parent=0 // pred_check_branch
    %49 = sbr.rel (0) target = $region53
  $region52: #{_trdecoder_impl.1} parent=0 // pred_region
    _
  $region53: #{_trdecoder_impl.1} parent=0 // pred_fallthru
    _
  // Predicated region
  $region54: #{_trdecoder_impl.1} parent=0 // pred_check
    _
  $region55: #{_trdecoder_impl.1} parent=0 // pred_check_branch
    %51 = sbr.rel (0) target = $region57
  $region56: #{_trdecoder_impl.1} parent=0 // pred_region
    _
  $region57: #{_trdecoder_impl.1} parent=0 // pred_fallthru
    _
  // Predicated region
  $region58: #{_trdecoder_impl.1} parent=0 // pred_check
    _
  $region59: #{_trdecoder_impl.1} parent=0 // pred_check_branch
    %53 = sbr.rel (0) target = $region61
  $region60: #{_trdecoder_impl.1} parent=0 // pred_region
    _
  $region61: #{_trdecoder_impl.1} parent=0 // pred_fallthru
    _
  // Predicated region
  $region62: #{_trdecoder_impl.1} parent=0 // pred_check
    _
  $region63: #{_trdecoder_impl.1} parent=0 // pred_check_branch
    %55 = sbr.rel (0) target = $region65
  $region64: #{_trdecoder_impl.1} parent=0 // pred_region
    _
  $region65: #{_trdecoder_impl.1} parent=0 // pred_fallthru
    _
  // Predicated region
  $region66: #{_trdecoder_impl.1} parent=0 // pred_check
    _
  $region67: #{_trdecoder_impl.1} parent=0 // pred_check_branch
    %57 = sbr.rel (0) target = $region69
  $region68: #{_trdecoder_impl.1} parent=0 // pred_region
    _
  $region69: #{_trdecoder_impl.1} parent=0 // pred_fallthru
    _
  // Predicated region
  $region70: #{_trdecoder_impl.1} parent=0 // pred_check
    _
  $region71: #{_trdecoder_impl.1} parent=0 // pred_check_branch
    %59 = sbr.rel (0) target = $region73
  $region72: #{_trdecoder_impl.1} parent=0 // pred_region
    _
  $region73: #{_trdecoder_impl.1} parent=0 // pred_fallthru
    _
  // Predicated region
  $region74: #{_trdecoder_impl.1} parent=0 // pred_check
    _
  $region75: #{_trdecoder_impl.1} parent=0 // pred_check_branch
    %61 = sbr.rel (0) target = $region77
  $region76: #{_trdecoder_impl.1} parent=0 // pred_region
    _
  $region77: #{_trdecoder_impl.1} parent=0 // pred_fallthru
    _
  %v63 = vld [vmem:[%s0] sm:$0xf]
  %v64 = vld [vmem:[%s0 + $0x4] sm:$0xf]
  %v65 = vld [vmem:[%s0 + $0x8] sm:$0xf]
  %v66 = vld [vmem:[%s0 + $0xc] sm:$0xf]
  %v67 = vunpack.c.l.bf16 %v63
  %v68 = vunpack.c.l.bf16 %v64
  %v69 = vunpack.c.l.bf16 %v65
  %v70 = vunpack.c.l.bf16 %v66
  %v71 = vld [vmem:[%s1] sm:$0xf]
  %v72 = vld [vmem:[%s1 + $0x4] sm:$0xf]
  %v73 = vld [vmem:[%s1 + $0x8] sm:$0xf]
  %v74 = vld [vmem:[%s1 + $0xc] sm:$0xf]
  %v75 = vunpack.c.l.bf16 %v71
  %v76 = vunpack.c.l.bf16 %v72
  %v77 = vunpack.c.l.bf16 %v73
  %v78 = vunpack.c.l.bf16 %v74
  %v79 = vld [vmem:[%s2] sm:$0xf]
  %v80 = vld [vmem:[%s2 + $0x4] sm:$0xf]
  %v81 = vld [vmem:[%s2 + $0x8] sm:$0xf]
  %v82 = vld [vmem:[%s2 + $0xc] sm:$0xf]
  %v83 = vunpack.c.l.bf16 %v79
  %v84 = vunpack.c.l.bf16 %v80
  %v85 = vunpack.c.l.bf16 %v81
  %v86 = vunpack.c.l.bf16 %v82
  %v87 = vld [vmem:[%s18] sm:$0xff]
  %v88 = vld [vmem:[%s18 + $0x8] sm:$0xff]
  %v89 = vadd.f32 %v67, %v83
  %v90 = vadd.f32 %v68, %v84
  %v91 = vadd.f32 %v69, %v85
  %v92 = vadd.f32 %v70, %v86
  %v93 = vpack.c.bf16 %v90, %v89
  %v94 = vpack.c.bf16 %v92, %v91
  %v95 = vld [vmem:[%s3] sm:$0xf]
  %v96 = vld [vmem:[%s3 + $0x4] sm:$0xf]
  %v97 = vld [vmem:[%s3 + $0x8] sm:$0xf]
  %v98 = vld [vmem:[%s3 + $0xc] sm:$0xf]
  %v99 = vlaneseq
  %v100 = vshrl.u32 %v99, 7
  %v101 = vsub.s32 0, %v100
  %v102 = vrot.slane %v87, %v101
  %v107 = vunpack.c.l.b16 %v95
  %v108 = vunpack.c.l.b16 %v96
  %v109 = vunpack.c.l.b16 %v97
  %v110 = vunpack.c.l.b16 %v98
  %v111 = vpack.c.b16 %v108, %v107
  %v112 = vpack.c.b16 %v110, %v109
  %vm115 = vcmask 261120
  %v117 = vsel %vm115, %v93, 0
  %v120 = vsel %vm115, %v94, 0
  %122 = vmatprep.subr.bf16.mxu0 0
  %123 = vmatpush1.bf16.msra.mxu0 %v111
  %124 = vmatprep.subr.bf16.mxu0 0
  %125 = vmatpush1.bf16.msra.mxu0 %v112
  %126 = vmatprep.subr.bf16.mxu0 0
  %127 = vmatpush1.bf16.msra.mxu0 0
  %128 = vmatprep.subr.bf16.mxu0 0
  %129 = vmatpush1.bf16.msra.mxu0 0
  %130 = vmatprep.subr.bf16.mxu0 0
  %131 = vmatpush1.bf16.msra.mxu0 0
  %132 = vmatprep.subr.bf16.mxu0 0
  %133 = vmatpush1.bf16.msra.mxu0 0
  %134 = vmatprep.subr.bf16.mxu0 0
  %135 = vmatpush1.bf16.msra.mxu0 0
  %136 = vmatprep.subr.bf16.mxu0 0
  %137 = vmatpush1.bf16.msra.mxu0 0
  %138 = vmatprep.subr.bf16.mxu0 0
  %139 = vmatpush1.bf16.msra.mxu0 0
  %140 = vmatprep.subr.bf16.mxu0 0
  %141 = vmatpush1.bf16.msra.mxu0 0
  %142 = vmatprep.subr.bf16.mxu0 0
  %143 = vmatpush1.bf16.msra.mxu0 0
  %144 = vmatprep.subr.bf16.mxu0 0
  %145 = vmatpush1.bf16.msra.mxu0 0
  %146 = vmatprep.subr.bf16.mxu0 0
  %147 = vmatpush1.bf16.msra.mxu0 0
  %148 = vmatprep.subr.bf16.mxu0 0
  %149 = vmatpush1.bf16.msra.mxu0 0
  %150 = vmatprep.subr.bf16.mxu0 0
  %151 = vmatpush1.bf16.msra.mxu0 0
  %152 = vmatprep.subr.bf16.mxu0 0
  %153 = vmatpush1.bf16.msra.mxu0 0
  %154 = vmatprep.mubr.bf16.mxu0 0
  %155 = vmatmul.mubr.bf16.gmra.mrb[0].mxu0 %v117
  %v156 = vpop.f32.mrb[0].mxu0
  %v157 = vadd.f32 %v102, %v156
  %v158 = vpop.f32.mrb[0].mxu0
  %v159 = vpop.f32.mrb[0].mxu0
  %v160 = vadd.f32 %v102, %v159
  %v161 = vpop.f32.mrb[0].mxu0
  %162 = vmatprep.mubr.bf16.mxu0 0
  %163 = vmatmul.mubr.bf16.gmra.mrb[0].mxu0 %v120
  %v164 = vpop.f32.mrb[0].mxu0
  %v165 = vadd.f32 %v102, %v164
  %v166 = vpop.f32.mrb[0].mxu0
  %v167 = vpop.f32.mrb[0].mxu0
  %v168 = vadd.f32 %v102, %v167
  %v169 = vpop.f32.mrb[0].mxu0
  %170 = vdwg.mxu0
  %v171 = vld [vmem:[%s4] sm:$0xf]
  %v172 = vld [vmem:[%s4 + $0x4] sm:$0xf]
  %v173 = vld [vmem:[%s4 + $0x8] sm:$0xf]
  %v174 = vld [vmem:[%s4 + $0xc] sm:$0xf]
  %v175 = vlaneseq
  %v176 = vshrl.u32 %v175, 7
  %v177 = vsub.s32 1, %v176
  %v178 = vrot.slane %v87, %v177
  %v183 = vunpack.c.l.b16 %v171
  %v184 = vunpack.c.l.b16 %v172
  %v185 = vunpack.c.l.b16 %v173
  %v186 = vunpack.c.l.b16 %v174
  %v187 = vpack.c.b16 %v184, %v183
  %v188 = vpack.c.b16 %v186, %v185
  %191 = vmatprep.subr.bf16.mxu0 0
  %192 = vmatpush1.bf16.msra.mxu0 %v187
  %193 = vmatprep.subr.bf16.mxu0 0
  %194 = vmatpush1.bf16.msra.mxu0 %v188
  %195 = vmatprep.subr.bf16.mxu0 0
  %196 = vmatpush1.bf16.msra.mxu0 0
  %197 = vmatprep.subr.bf16.mxu0 0
  %198 = vmatpush1.bf16.msra.mxu0 0
  %199 = vmatprep.subr.bf16.mxu0 0
  %200 = vmatpush1.bf16.msra.mxu0 0
  %201 = vmatprep.subr.bf16.mxu0 0
  %202 = vmatpush1.bf16.msra.mxu0 0
  %203 = vmatprep.subr.bf16.mxu0 0
  %204 = vmatpush1.bf16.msra.mxu0 0
  %205 = vmatprep.subr.bf16.mxu0 0
  %206 = vmatpush1.bf16.msra.mxu0 0
  %207 = vmatprep.subr.bf16.mxu0 0
  %208 = vmatpush1.bf16.msra.mxu0 0
  %209 = vmatprep.subr.bf16.mxu0 0
  %210 = vmatpush1.bf16.msra.mxu0 0
  %211 = vmatprep.subr.bf16.mxu0 0
  %212 = vmatpush1.bf16.msra.mxu0 0
  %213 = vmatprep.subr.bf16.mxu0 0
  %214 = vmatpush1.bf16.msra.mxu0 0
  %215 = vmatprep.subr.bf16.mxu0 0
  %216 = vmatpush1.bf16.msra.mxu0 0
  %217 = vmatprep.subr.bf16.mxu0 0
  %218 = vmatpush1.bf16.msra.mxu0 0
  %219 = vmatprep.subr.bf16.mxu0 0
  %220 = vmatpush1.bf16.msra.mxu0 0
  %221 = vmatprep.subr.bf16.mxu0 0
  %222 = vmatpush1.bf16.msra.mxu0 0
  %223 = vmatprep.mubr.bf16.mxu0 0
  %224 = vmatmul.mubr.bf16.gmra.mrb[0].mxu0 %v117
  %v225 = vpop.f32.mrb[0].mxu0
  %v226 = vadd.f32 %v178, %v225
  %v227 = vpop.f32.mrb[0].mxu0
  %v228 = vpop.f32.mrb[0].mxu0
  %v229 = vadd.f32 %v178, %v228
  %v230 = vpop.f32.mrb[0].mxu0
  %231 = vmatprep.mubr.bf16.mxu0 0
  %232 = vmatmul.mubr.bf16.gmra.mrb[0].mxu0 %v120
  %v233 = vpop.f32.mrb[0].mxu0
  %v234 = vadd.f32 %v178, %v233
  %v235 = vpop.f32.mrb[0].mxu0
  %v236 = vpop.f32.mrb[0].mxu0
  %v237 = vadd.f32 %v178, %v236
  %v238 = vpop.f32.mrb[0].mxu0
  %239 = vdwg.mxu0
  %v240 = vpack.c.bf16 %v68, %v67
  %v241 = vpack.c.bf16 %v70, %v69
  %v242 = vld [vmem:[%s5] sm:$0xf]
  %v243 = vld [vmem:[%s5 + $0x4] sm:$0xf]
  %v244 = vld [vmem:[%s5 + $0x8] sm:$0xf]
  %v245 = vld [vmem:[%s5 + $0xc] sm:$0xf]
  %v246 = vlaneseq
  %v247 = vshrl.u32 %v246, 7
  %v248 = vsub.s32 2, %v247
  %v249 = vrot.slane %v87, %v248
  %v254 = vunpack.c.l.b16 %v242
  %v255 = vunpack.c.l.b16 %v243
  %v256 = vunpack.c.l.b16 %v244
  %v257 = vunpack.c.l.b16 %v245
  %v258 = vpack.c.b16 %v255, %v254
  %v259 = vpack.c.b16 %v257, %v256
  %v263 = vsel %vm115, %v240, 0
  %v266 = vsel %vm115, %v241, 0
  %268 = vmatprep.subr.bf16.mxu0 0
  %269 = vmatpush1.bf16.msra.mxu0 %v258
  %270 = vmatprep.subr.bf16.mxu0 0
  %271 = vmatpush1.bf16.msra.mxu0 %v259
  %272 = vmatprep.subr.bf16.mxu0 0
  %273 = vmatpush1.bf16.msra.mxu0 0
  %274 = vmatprep.subr.bf16.mxu0 0
  %275 = vmatpush1.bf16.msra.mxu0 0
  %276 = vmatprep.subr.bf16.mxu0 0
  %277 = vmatpush1.bf16.msra.mxu0 0
  %278 = vmatprep.subr.bf16.mxu0 0
  %279 = vmatpush1.bf16.msra.mxu0 0
  %280 = vmatprep.subr.bf16.mxu0 0
  %281 = vmatpush1.bf16.msra.mxu0 0
  %282 = vmatprep.subr.bf16.mxu0 0
  %283 = vmatpush1.bf16.msra.mxu0 0
  %284 = vmatprep.subr.bf16.mxu0 0
  %285 = vmatpush1.bf16.msra.mxu0 0
  %286 = vmatprep.subr.bf16.mxu0 0
  %287 = vmatpush1.bf16.msra.mxu0 0
  %288 = vmatprep.subr.bf16.mxu0 0
  %289 = vmatpush1.bf16.msra.mxu0 0
  %290 = vmatprep.subr.bf16.mxu0 0
  %291 = vmatpush1.bf16.msra.mxu0 0
  %292 = vmatprep.subr.bf16.mxu0 0
  %293 = vmatpush1.bf16.msra.mxu0 0
  %294 = vmatprep.subr.bf16.mxu0 0
  %295 = vmatpush1.bf16.msra.mxu0 0
  %296 = vmatprep.subr.bf16.mxu0 0
  %297 = vmatpush1.bf16.msra.mxu0 0
  %298 = vmatprep.subr.bf16.mxu0 0
  %299 = vmatpush1.bf16.msra.mxu0 0
  %300 = vmatprep.mubr.bf16.mxu0 0
  %301 = vmatmul.mubr.bf16.gmra.mrb[0].mxu0 %v263
  %v302 = vpop.f32.mrb[0].mxu0
  %v303 = vadd.f32 %v249, %v302
  %v304 = vpop.f32.mrb[0].mxu0
  %v305 = vpop.f32.mrb[0].mxu0
  %v306 = vadd.f32 %v249, %v305
  %v307 = vpop.f32.mrb[0].mxu0
  %308 = vmatprep.mubr.bf16.mxu0 0
  %309 = vmatmul.mubr.bf16.gmra.mrb[0].mxu0 %v266
  %v310 = vpop.f32.mrb[0].mxu0
  %v311 = vadd.f32 %v249, %v310
  %v312 = vpop.f32.mrb[0].mxu0
  %v313 = vpop.f32.mrb[0].mxu0
  %v314 = vadd.f32 %v249, %v313
  %v315 = vpop.f32.mrb[0].mxu0
  %316 = vdwg.mxu0
  %v317 = vpack.c.bf16 %v160, %v157
  %v318 = vpack.c.bf16 %v168, %v165
  %v319 = vpack.c.bf16 %v229, %v226
  %v320 = vpack.c.bf16 %v237, %v234
  %v322 = vsel %vm115, %v317, 0
  %v325 = vsel %vm115, %v319, 0
  %327 = vmatprep.subr.bf16.mxu0 0
  %328 = vmatpush1.bf16.xpose.msra.mxu0 %v325
  %329 = vmatprep.subr.bf16.mxu0 0
  %330 = vmatpush1.bf16.xpose.msra.mxu0 0
  %331 = vmatprep.subr.bf16.mxu0 0
  %332 = vmatpush1.bf16.xpose.msra.mxu0 0
  %333 = vmatprep.subr.bf16.mxu0 0
  %334 = vmatpush1.bf16.xpose.msra.mxu0 0
  %335 = vmatprep.subr.bf16.mxu0 0
  %336 = vmatpush1.bf16.xpose.msra.mxu0 0
  %337 = vmatprep.subr.bf16.mxu0 0
  %338 = vmatpush1.bf16.xpose.msra.mxu0 0
  %339 = vmatprep.subr.bf16.mxu0 0
  %340 = vmatpush1.bf16.xpose.msra.mxu0 0
  %341 = vmatprep.subr.bf16.mxu0 0
  %342 = vmatpush1.bf16.xpose.msra.mxu0 0
  %343 = vmatprep.subr.bf16.mxu0 0
  %344 = vmatpush1.bf16.xpose.msra.mxu0 0
  %345 = vmatprep.subr.bf16.mxu0 0
  %346 = vmatpush1.bf16.xpose.msra.mxu0 0
  %347 = vmatprep.subr.bf16.mxu0 0
  %348 = vmatpush1.bf16.xpose.msra.mxu0 0
  %349 = vmatprep.subr.bf16.mxu0 0
  %350 = vmatpush1.bf16.xpose.msra.mxu0 0
  %351 = vmatprep.subr.bf16.mxu0 0
  %352 = vmatpush1.bf16.xpose.msra.mxu0 0
  %353 = vmatprep.subr.bf16.mxu0 0
  %354 = vmatpush1.bf16.xpose.msra.mxu0 0
  %355 = vmatprep.subr.bf16.mxu0 0
  %356 = vmatpush1.bf16.xpose.msra.mxu0 0
  %357 = vmatprep.subr.bf16.mxu0 0
  %358 = vmatpush1.bf16.xpose.msra.mxu0 0
  %359 = vmatprep.mubr.bf16.mxu0 0
  %360 = vmatmul.mubr.bf16.gmra.mrb[0].mxu0 %v322
  %v361 = vpop.f32.mrb[0].mxu0
  %v362 = vadd.f32 0.0, %v361
  %v363 = vpop.f32.mrb[0].mxu0
  %v364 = vpop.f32.mrb[0].mxu0
  %v365 = vadd.f32 0.0, %v364
  %v366 = vpop.f32.mrb[0].mxu0
  %367 = vdwg.mxu0
  %v369 = vsel %vm115, %v318, 0
  %v372 = vsel %vm115, %v320, 0
  %374 = vmatprep.subr.bf16.mxu0 0
  %375 = vmatpush1.bf16.xpose.msra.mxu0 %v372
  %376 = vmatprep.subr.bf16.mxu0 0
  %377 = vmatpush1.bf16.xpose.msra.mxu0 0
  %378 = vmatprep.subr.bf16.mxu0 0
  %379 = vmatpush1.bf16.xpose.msra.mxu0 0
  %380 = vmatprep.subr.bf16.mxu0 0
  %381 = vmatpush1.bf16.xpose.msra.mxu0 0
  %382 = vmatprep.subr.bf16.mxu0 0
  %383 = vmatpush1.bf16.xpose.msra.mxu0 0
  %384 = vmatprep.subr.bf16.mxu0 0
  %385 = vmatpush1.bf16.xpose.msra.mxu0 0
  %386 = vmatprep.subr.bf16.mxu0 0
  %387 = vmatpush1.bf16.xpose.msra.mxu0 0
  %388 = vmatprep.subr.bf16.mxu0 0
  %389 = vmatpush1.bf16.xpose.msra.mxu0 0
  %390 = vmatprep.subr.bf16.mxu0 0
  %391 = vmatpush1.bf16.xpose.msra.mxu0 0
  %392 = vmatprep.subr.bf16.mxu0 0
  %393 = vmatpush1.bf16.xpose.msra.mxu0 0
  %394 = vmatprep.subr.bf16.mxu0 0
  %395 = vmatpush1.bf16.xpose.msra.mxu0 0
  %396 = vmatprep.subr.bf16.mxu0 0
  %397 = vmatpush1.bf16.xpose.msra.mxu0 0
  %398 = vmatprep.subr.bf16.mxu0 0
  %399 = vmatpush1.bf16.xpose.msra.mxu0 0
  %400 = vmatprep.subr.bf16.mxu0 0
  %401 = vmatpush1.bf16.xpose.msra.mxu0 0
  %402 = vmatprep.subr.bf16.mxu0 0
  %403 = vmatpush1.bf16.xpose.msra.mxu0 0
  %404 = vmatprep.subr.bf16.mxu0 0
  %405 = vmatpush1.bf16.xpose.msra.mxu0 0
  %406 = vmatprep.mubr.bf16.mxu0 0
  %407 = vmatmul.mubr.bf16.gmra.mrb[0].mxu0 %v369
  %v408 = vpop.f32.mrb[0].mxu0
  %v409 = vadd.f32 0.0, %v408
  %v410 = vpop.f32.mrb[0].mxu0
  %v411 = vpop.f32.mrb[0].mxu0
  %v412 = vadd.f32 0.0, %v411
  %v413 = vpop.f32.mrb[0].mxu0
  %414 = vdwg.mxu0
  %vm415 = vcmask 130048
  %v416 = vsel %vm415, %v362, -inf
  %417 = vmax.xlane.f32.xlu0 %v416
  %v418 = vpop.xlane.xlu0 %417
  %v419 = vsel %vm415, %v365, -inf
  %420 = vmax.xlane.f32.xlu0 %v419
  %v421 = vpop.xlane.xlu0 %420
  %v422 = vsel %vm415, %v409, -inf
  %423 = vmax.xlane.f32.xlu0 %v422
  %v424 = vpop.xlane.xlu0 %423
  %v425 = vsel %vm415, %v412, -inf
  %426 = vmax.xlane.f32.xlu0 %v425
  %v427 = vpop.xlane.xlu0 %426
  %v428 = vsub.f32 %v362, %v418
  %v429 = vsub.f32 %v365, %v421
  %v430 = vsub.f32 %v409, %v424
  %v431 = vsub.f32 %v412, %v427
  %v432 = vmul.f32 %v428, 1.442695
  %v433 = vpow.pop %v432
  %v434 = vmul.f32 %v429, 1.442695
  %v435 = vpow.pop %v434
  %v436 = vmul.f32 %v430, 1.442695
  %v437 = vpow.pop %v436
  %v438 = vmul.f32 %v431, 1.442695
  %v439 = vpow.pop %v438
  %v440 = vsel %vm415, %v433, 0.0
  %441 = vadd.xlane.f32.xlu0 %v440
  %v442 = vpop.xlane.xlu0 %441
  %v443 = vsel %vm415, %v435, 0.0
  %444 = vadd.xlane.f32.xlu0 %v443
  %v445 = vpop.xlane.xlu0 %444
  %v446 = vsel %vm415, %v437, 0.0
  %447 = vadd.xlane.f32.xlu0 %v446
  %v448 = vpop.xlane.xlu0 %447
  %v449 = vsel %vm415, %v439, 0.0
  %450 = vadd.xlane.f32.xlu0 %v449
  %v451 = vpop.xlane.xlu0 %450
  %v452 = vrcp.pop %v442
  %v453 = vmul.f32 1.0, %v452
  %v454 = vrcp.pop %v445
  %v455 = vmul.f32 1.0, %v454
  %v456 = vrcp.pop %v448
  %v457 = vmul.f32 1.0, %v456
  %v458 = vrcp.pop %v451
  %v459 = vmul.f32 1.0, %v458
  %v460 = vmul.f32 %v433, %v453
  %v461 = vmul.f32 %v435, %v455
  %v462 = vmul.f32 %v437, %v457
  %v463 = vmul.f32 %v439, %v459
  %v464 = vpack.c.bf16 %v461, %v460
  %v465 = vpack.c.bf16 %v463, %v462
  %v466 = vpack.c.bf16 %v306, %v303
  %v467 = vpack.c.bf16 %v314, %v311
  %v469 = vsel %vm415, %v464, 0
  %471 = vmatprep.subr.bf16.mxu0 0
  %472 = vmatpush1.bf16.msra.mxu0 %v466
  %473 = vmatprep.subr.bf16.mxu0 0
  %474 = vmatpush1.bf16.msra.mxu0 0
  %475 = vmatprep.subr.bf16.mxu0 0
  %476 = vmatpush1.bf16.msra.mxu0 0
  %477 = vmatprep.subr.bf16.mxu0 0
  %478 = vmatpush1.bf16.msra.mxu0 0
  %479 = vmatprep.subr.bf16.mxu0 0
  %480 = vmatpush1.bf16.msra.mxu0 0
  %481 = vmatprep.subr.bf16.mxu0 0
  %482 = vmatpush1.bf16.msra.mxu0 0
  %483 = vmatprep.subr.bf16.mxu0 0
  %484 = vmatpush1.bf16.msra.mxu0 0
  %485 = vmatprep.subr.bf16.mxu0 0
  %486 = vmatpush1.bf16.msra.mxu0 0
  %487 = vmatprep.subr.bf16.mxu0 0
  %488 = vmatpush1.bf16.msra.mxu0 0
  %489 = vmatprep.subr.bf16.mxu0 0
  %490 = vmatpush1.bf16.msra.mxu0 0
  %491 = vmatprep.subr.bf16.mxu0 0
  %492 = vmatpush1.bf16.msra.mxu0 0
  %493 = vmatprep.subr.bf16.mxu0 0
  %494 = vmatpush1.bf16.msra.mxu0 0
  %495 = vmatprep.subr.bf16.mxu0 0
  %496 = vmatpush1.bf16.msra.mxu0 0
  %497 = vmatprep.subr.bf16.mxu0 0
  %498 = vmatpush1.bf16.msra.mxu0 0
  %499 = vmatprep.subr.bf16.mxu0 0
  %500 = vmatpush1.bf16.msra.mxu0 0
  %501 = vmatprep.subr.bf16.mxu0 0
  %502 = vmatpush1.bf16.msra.mxu0 0
  %503 = vmatprep.mubr.bf16.mxu0 0
  %504 = vmatmul.mubr.bf16.gmra.mrb[0].mxu0 %v469
  %v505 = vpop.f32.mrb[0].mxu0
  %v506 = vadd.f32 0.0, %v505
  %v507 = vpop.f32.mrb[0].mxu0
  %v508 = vpop.f32.mrb[0].mxu0
  %v509 = vadd.f32 0.0, %v508
  %v510 = vpop.f32.mrb[0].mxu0
  %511 = vdwg.mxu0
  %v513 = vsel %vm415, %v465, 0
  %515 = vmatprep.subr.bf16.mxu0 0
  %516 = vmatpush1.bf16.msra.mxu0 %v467
  %517 = vmatprep.subr.bf16.mxu0 0
  %518 = vmatpush1.bf16.msra.mxu0 0
  %519 = vmatprep.subr.bf16.mxu0 0
  %520 = vmatpush1.bf16.msra.mxu0 0
  %521 = vmatprep.subr.bf16.mxu0 0
  %522 = vmatpush1.bf16.msra.mxu0 0
  %523 = vmatprep.subr.bf16.mxu0 0
  %524 = vmatpush1.bf16.msra.mxu0 0
  %525 = vmatprep.subr.bf16.mxu0 0
  %526 = vmatpush1.bf16.msra.mxu0 0
  %527 = vmatprep.subr.bf16.mxu0 0
  %528 = vmatpush1.bf16.msra.mxu0 0
  %529 = vmatprep.subr.bf16.mxu0 0
  %530 = vmatpush1.bf16.msra.mxu0 0
  %531 = vmatprep.subr.bf16.mxu0 0
  %532 = vmatpush1.bf16.msra.mxu0 0
  %533 = vmatprep.subr.bf16.mxu0 0
  %534 = vmatpush1.bf16.msra.mxu0 0
  %535 = vmatprep.subr.bf16.mxu0 0
  %536 = vmatpush1.bf16.msra.mxu0 0
  %537 = vmatprep.subr.bf16.mxu0 0
  %538 = vmatpush1.bf16.msra.mxu0 0
  %539 = vmatprep.subr.bf16.mxu0 0
  %540 = vmatpush1.bf16.msra.mxu0 0
  %541 = vmatprep.subr.bf16.mxu0 0
  %542 = vmatpush1.bf16.msra.mxu0 0
  %543 = vmatprep.subr.bf16.mxu0 0
  %544 = vmatpush1.bf16.msra.mxu0 0
  %545 = vmatprep.subr.bf16.mxu0 0
  %546 = vmatpush1.bf16.msra.mxu0 0
  %547 = vmatprep.mubr.bf16.mxu0 0
  %548 = vmatmul.mubr.bf16.gmra.mrb[0].mxu0 %v513
  %v549 = vpop.f32.mrb[0].mxu0
  %v550 = vadd.f32 0.0, %v549
  %v551 = vpop.f32.mrb[0].mxu0
  %v552 = vpop.f32.mrb[0].mxu0
  %v553 = vadd.f32 0.0, %v552
  %v554 = vpop.f32.mrb[0].mxu0
  %555 = vdwg.mxu0
  %v556 = vpack.c.bf16 %v509, %v506
  %v557 = vpack.c.bf16 %v553, %v550
  %v558 = vld [vmem:[%s6] sm:$0xf]
  %v559 = vld [vmem:[%s6 + $0x4] sm:$0xf]
  %v560 = vld [vmem:[%s6 + $0x8] sm:$0xf]
  %v561 = vld [vmem:[%s6 + $0xc] sm:$0xf]
  %v562 = vlaneseq
  %v563 = vshrl.u32 %v562, 7
  %v564 = vsub.s32 3, %v563
  %v565 = vrot.slane %v87, %v564
  %v570 = vunpack.c.l.b16 %v558
  %v571 = vunpack.c.l.b16 %v559
  %v572 = vunpack.c.l.b16 %v560
  %v573 = vunpack.c.l.b16 %v561
  %v574 = vpack.c.b16 %v571, %v570
  %v575 = vpack.c.b16 %v573, %v572
  %v579 = vsel %vm115, %v556, 0
  %v582 = vsel %vm115, %v557, 0
  %584 = vmatprep.subr.bf16.mxu0 0
  %585 = vmatpush1.bf16.msra.mxu0 %v574
  %586 = vmatprep.subr.bf16.mxu0 0
  %587 = vmatpush1.bf16.msra.mxu0 %v575
  %588 = vmatprep.subr.bf16.mxu0 0
  %589 = vmatpush1.bf16.msra.mxu0 0
  %590 = vmatprep.subr.bf16.mxu0 0
  %591 = vmatpush1.bf16.msra.mxu0 0
  %592 = vmatprep.subr.bf16.mxu0 0
  %593 = vmatpush1.bf16.msra.mxu0 0
  %594 = vmatprep.subr.bf16.mxu0 0
  %595 = vmatpush1.bf16.msra.mxu0 0
  %596 = vmatprep.subr.bf16.mxu0 0
  %597 = vmatpush1.bf16.msra.mxu0 0
  %598 = vmatprep.subr.bf16.mxu0 0
  %599 = vmatpush1.bf16.msra.mxu0 0
  %600 = vmatprep.subr.bf16.mxu0 0
  %601 = vmatpush1.bf16.msra.mxu0 0
  %602 = vmatprep.subr.bf16.mxu0 0
  %603 = vmatpush1.bf16.msra.mxu0 0
  %604 = vmatprep.subr.bf16.mxu0 0
  %605 = vmatpush1.bf16.msra.mxu0 0
  %606 = vmatprep.subr.bf16.mxu0 0
  %607 = vmatpush1.bf16.msra.mxu0 0
  %608 = vmatprep.subr.bf16.mxu0 0
  %609 = vmatpush1.bf16.msra.mxu0 0
  %610 = vmatprep.subr.bf16.mxu0 0
  %611 = vmatpush1.bf16.msra.mxu0 0
  %612 = vmatprep.subr.bf16.mxu0 0
  %613 = vmatpush1.bf16.msra.mxu0 0
  %614 = vmatprep.subr.bf16.mxu0 0
  %615 = vmatpush1.bf16.msra.mxu0 0
  %616 = vmatprep.mubr.bf16.mxu0 0
  %617 = vmatmul.mubr.bf16.gmra.mrb[0].mxu0 %v579
  %v618 = vpop.f32.mrb[0].mxu0
  %v619 = vadd.f32 %v565, %v618
  %v620 = vpop.f32.mrb[0].mxu0
  %v621 = vpop.f32.mrb[0].mxu0
  %v622 = vadd.f32 %v565, %v621
  %v623 = vpop.f32.mrb[0].mxu0
  %624 = vmatprep.mubr.bf16.mxu0 0
  %625 = vmatmul.mubr.bf16.gmra.mrb[0].mxu0 %v582
  %v626 = vpop.f32.mrb[0].mxu0
  %v627 = vadd.f32 %v565, %v626
  %v628 = vpop.f32.mrb[0].mxu0
  %v629 = vpop.f32.mrb[0].mxu0
  %v630 = vadd.f32 %v565, %v629
  %v631 = vpop.f32.mrb[0].mxu0
  %632 = vdwg.mxu0
  %v633 = vadd.f32 %v67, %v619
  %v634 = vadd.f32 %v68, %v622
  %v635 = vadd.f32 %v69, %v627
  %v636 = vadd.f32 %v70, %v630
  %v637 = vsel %vm115, %v633, 0.0
  %638 = vadd.xlane.f32.xlu0 %v637
  %v639 = vpop.xlane.xlu0 %638
  %v640 = vsel %vm115, %v634, 0.0
  %641 = vadd.xlane.f32.xlu0 %v640
  %v642 = vpop.xlane.xlu0 %641
  %v643 = vsel %vm115, %v635, 0.0
  %644 = vadd.xlane.f32.xlu0 %v643
  %v645 = vpop.xlane.xlu0 %644
  %v646 = vsel %vm115, %v636, 0.0
  %647 = vadd.xlane.f32.xlu0 %v646
  %v648 = vpop.xlane.xlu0 %647
  %v649 = vrcp.pop 32.0
  %v650 = vmul.f32 %v639, %v649
  %v651 = vmul.f32 %v642, %v649
  %v652 = vmul.f32 %v645, %v649
  %v653 = vmul.f32 %v648, %v649
  %v654 = vsub.f32 %v633, %v650
  %v655 = vsub.f32 %v634, %v651
  %v656 = vsub.f32 %v635, %v652
  %v657 = vsub.f32 %v636, %v653
  %v658 = vmul.f32 %v654, %v654
  %v659 = vmul.f32 %v655, %v655
  %v660 = vmul.f32 %v656, %v656
  %v661 = vmul.f32 %v657, %v657
  %v662 = vsel %vm115, %v658, 0.0
  %663 = vadd.xlane.f32.xlu0 %v662
  %v664 = vpop.xlane.xlu0 %663
  %v665 = vsel %vm115, %v659, 0.0
  %666 = vadd.xlane.f32.xlu0 %v665
  %v667 = vpop.xlane.xlu0 %666
  %v668 = vsel %vm115, %v660, 0.0
  %669 = vadd.xlane.f32.xlu0 %v668
  %v670 = vpop.xlane.xlu0 %669
  %v671 = vsel %vm115, %v661, 0.0
  %672 = vadd.xlane.f32.xlu0 %v671
  %v673 = vpop.xlane.xlu0 %672
  %v674 = vmul.f32 %v664, %v649
  %v675 = vmul.f32 %v667, %v649
  %v676 = vmul.f32 %v670, %v649
  %v677 = vmul.f32 %v673, %v649
  %v678 = vadd.f32 %v674, 1e-05
  %v679 = vadd.f32 %v675, 1e-05
  %v680 = vadd.f32 %v676, 1e-05
  %v681 = vadd.f32 %v677, 1e-05
  %v682 = vrsqrt.pop %v678
  %v683 = vrsqrt.pop %v679
  %v684 = vrsqrt.pop %v680
  %v685 = vrsqrt.pop %v681
  %v686 = vmul.f32 %v654, %v682
  %v687 = vmul.f32 %v655, %v683
  %v688 = vmul.f32 %v656, %v684
  %v689 = vmul.f32 %v657, %v685
  %v690 = vlaneseq
  %v691 = vshrl.u32 %v690, 7
  %v692 = vsub.s32 1, %v691
  %v693 = vrot.slane %v88, %v692
  %v694 = vmul.f32 %v686, %v693
  %v695 = vmul.f32 %v687, %v693
  %v696 = vmul.f32 %v688, %v693
  %v697 = vmul.f32 %v689, %v693
  %v698 = vlaneseq
  %v699 = vshrl.u32 %v698, 7
  %v700 = vsub.s32 2, %v699
  %v701 = vrot.slane %v88, %v700
  %v702 = vadd.f32 %v694, %v701
  %v703 = vadd.f32 %v695, %v701
  %v704 = vadd.f32 %v696, %v701
  %v705 = vadd.f32 %v697, %v701
  %v706 = vadd.f32 %v702, %v83
  %v707 = vadd.f32 %v703, %v84
  %v708 = vadd.f32 %v704, %v85
  %v709 = vadd.f32 %v705, %v86
  %v710 = vpack.c.bf16 %v707, %v706
  %v711 = vpack.c.bf16 %v709, %v708
  %v712 = vld [vmem:[%s7] sm:$0xf]
  %v713 = vld [vmem:[%s7 + $0x4] sm:$0xf]
  %v714 = vld [vmem:[%s7 + $0x8] sm:$0xf]
  %v715 = vld [vmem:[%s7 + $0xc] sm:$0xf]
  %v716 = vlaneseq
  %v717 = vshrl.u32 %v716, 7
  %v718 = vsub.s32 4, %v717
  %v719 = vrot.slane %v87, %v718
  %v724 = vunpack.c.l.b16 %v712
  %v725 = vunpack.c.l.b16 %v713
  %v726 = vunpack.c.l.b16 %v714
  %v727 = vunpack.c.l.b16 %v715
  %v728 = vpack.c.b16 %v725, %v724
  %v729 = vpack.c.b16 %v727, %v726
  %v733 = vsel %vm115, %v710, 0
  %v736 = vsel %vm115, %v711, 0
  %738 = vmatprep.subr.bf16.mxu0 0
  %739 = vmatpush1.bf16.msra.mxu0 %v728
  %740 = vmatprep.subr.bf16.mxu0 0
  %741 = vmatpush1.bf16.msra.mxu0 %v729
  %742 = vmatprep.subr.bf16.mxu0 0
  %743 = vmatpush1.bf16.msra.mxu0 0
  %744 = vmatprep.subr.bf16.mxu0 0
  %745 = vmatpush1.bf16.msra.mxu0 0
  %746 = vmatprep.subr.bf16.mxu0 0
  %747 = vmatpush1.bf16.msra.mxu0 0
  %748 = vmatprep.subr.bf16.mxu0 0
  %749 = vmatpush1.bf16.msra.mxu0 0
  %750 = vmatprep.subr.bf16.mxu0 0
  %751 = vmatpush1.bf16.msra.mxu0 0
  %752 = vmatprep.subr.bf16.mxu0 0
  %753 = vmatpush1.bf16.msra.mxu0 0
  %754 = vmatprep.subr.bf16.mxu0 0
  %755 = vmatpush1.bf16.msra.mxu0 0
  %756 = vmatprep.subr.bf16.mxu0 0
  %757 = vmatpush1.bf16.msra.mxu0 0
  %758 = vmatprep.subr.bf16.mxu0 0
  %759 = vmatpush1.bf16.msra.mxu0 0
  %760 = vmatprep.subr.bf16.mxu0 0
  %761 = vmatpush1.bf16.msra.mxu0 0
  %762 = vmatprep.subr.bf16.mxu0 0
  %763 = vmatpush1.bf16.msra.mxu0 0
  %764 = vmatprep.subr.bf16.mxu0 0
  %765 = vmatpush1.bf16.msra.mxu0 0
  %766 = vmatprep.subr.bf16.mxu0 0
  %767 = vmatpush1.bf16.msra.mxu0 0
  %768 = vmatprep.subr.bf16.mxu0 0
  %769 = vmatpush1.bf16.msra.mxu0 0
  %770 = vmatprep.mubr.bf16.mxu0 0
  %771 = vmatmul.mubr.bf16.gmra.mrb[0].mxu0 %v733
  %v772 = vpop.f32.mrb[0].mxu0
  %v773 = vadd.f32 %v719, %v772
  %v774 = vpop.f32.mrb[0].mxu0
  %v775 = vpop.f32.mrb[0].mxu0
  %v776 = vadd.f32 %v719, %v775
  %v777 = vpop.f32.mrb[0].mxu0
  %778 = vmatprep.mubr.bf16.mxu0 0
  %779 = vmatmul.mubr.bf16.gmra.mrb[0].mxu0 %v736
  %v780 = vpop.f32.mrb[0].mxu0
  %v781 = vadd.f32 %v719, %v780
  %v782 = vpop.f32.mrb[0].mxu0
  %v783 = vpop.f32.mrb[0].mxu0
  %v784 = vadd.f32 %v719, %v783
  %v785 = vpop.f32.mrb[0].mxu0
  %786 = vdwg.mxu0
  %v787 = vpack.c.bf16 %v76, %v75
  %v788 = vpack.c.bf16 %v78, %v77
  %v789 = vld [vmem:[%s8] sm:$0xf]
  %v790 = vld [vmem:[%s8 + $0x4] sm:$0xf]
  %v791 = vld [vmem:[%s8 + $0x8] sm:$0xf]
  %v792 = vld [vmem:[%s8 + $0xc] sm:$0xf]
  %v793 = vlaneseq
  %v794 = vshrl.u32 %v793, 7
  %v795 = vsub.s32 5, %v794
  %v796 = vrot.slane %v87, %v795
  %v801 = vunpack.c.l.b16 %v789
  %v802 = vunpack.c.l.b16 %v790
  %v803 = vunpack.c.l.b16 %v791
  %v804 = vunpack.c.l.b16 %v792
  %v805 = vpack.c.b16 %v802, %v801
  %v806 = vpack.c.b16 %v804, %v803
  %v810 = vsel %vm115, %v787, 0
  %v813 = vsel %vm115, %v788, 0
  %815 = vmatprep.subr.bf16.mxu0 0
  %816 = vmatpush1.bf16.msra.mxu0 %v805
  %817 = vmatprep.subr.bf16.mxu0 0
  %818 = vmatpush1.bf16.msra.mxu0 %v806
  %819 = vmatprep.subr.bf16.mxu0 0
  %820 = vmatpush1.bf16.msra.mxu0 0
  %821 = vmatprep.subr.bf16.mxu0 0
  %822 = vmatpush1.bf16.msra.mxu0 0
  %823 = vmatprep.subr.bf16.mxu0 0
  %824 = vmatpush1.bf16.msra.mxu0 0
  %825 = vmatprep.subr.bf16.mxu0 0
  %826 = vmatpush1.bf16.msra.mxu0 0
  %827 = vmatprep.subr.bf16.mxu0 0
  %828 = vmatpush1.bf16.msra.mxu0 0
  %829 = vmatprep.subr.bf16.mxu0 0
  %830 = vmatpush1.bf16.msra.mxu0 0
  %831 = vmatprep.subr.bf16.mxu0 0
  %832 = vmatpush1.bf16.msra.mxu0 0
  %833 = vmatprep.subr.bf16.mxu0 0
  %834 = vmatpush1.bf16.msra.mxu0 0
  %835 = vmatprep.subr.bf16.mxu0 0
  %836 = vmatpush1.bf16.msra.mxu0 0
  %837 = vmatprep.subr.bf16.mxu0 0
  %838 = vmatpush1.bf16.msra.mxu0 0
  %839 = vmatprep.subr.bf16.mxu0 0
  %840 = vmatpush1.bf16.msra.mxu0 0
  %841 = vmatprep.subr.bf16.mxu0 0
  %842 = vmatpush1.bf16.msra.mxu0 0
  %843 = vmatprep.subr.bf16.mxu0 0
  %844 = vmatpush1.bf16.msra.mxu0 0
  %845 = vmatprep.subr.bf16.mxu0 0
  %846 = vmatpush1.bf16.msra.mxu0 0
  %847 = vmatprep.mubr.bf16.mxu0 0
  %848 = vmatmul.mubr.bf16.gmra.mrb[0].mxu0 %v810
  %v849 = vpop.f32.mrb[0].mxu0
  %v850 = vadd.f32 %v796, %v849
  %v851 = vpop.f32.mrb[0].mxu0
  %v852 = vpop.f32.mrb[0].mxu0
  %v853 = vadd.f32 %v796, %v852
  %v854 = vpop.f32.mrb[0].mxu0
  %855 = vmatprep.mubr.bf16.mxu0 0
  %856 = vmatmul.mubr.bf16.gmra.mrb[0].mxu0 %v813
  %v857 = vpop.f32.mrb[0].mxu0
  %v858 = vadd.f32 %v796, %v857
  %v859 = vpop.f32.mrb[0].mxu0
  %v860 = vpop.f32.mrb[0].mxu0
  %v861 = vadd.f32 %v796, %v860
  %v862 = vpop.f32.mrb[0].mxu0
  %863 = vdwg.mxu0
  %v864 = vld [vmem:[%s9] sm:$0xf]
  %v865 = vld [vmem:[%s9 + $0x4] sm:$0xf]
  %v866 = vld [vmem:[%s9 + $0x8] sm:$0xf]
  %v867 = vld [vmem:[%s9 + $0xc] sm:$0xf]
  %v868 = vlaneseq
  %v869 = vshrl.u32 %v868, 7
  %v870 = vsub.s32 6, %v869
  %v871 = vrot.slane %v87, %v870
  %v876 = vunpack.c.l.b16 %v864
  %v877 = vunpack.c.l.b16 %v865
  %v878 = vunpack.c.l.b16 %v866
  %v879 = vunpack.c.l.b16 %v867
  %v880 = vpack.c.b16 %v877, %v876
  %v881 = vpack.c.b16 %v879, %v878
  %884 = vmatprep.subr.bf16.mxu0 0
  %885 = vmatpush1.bf16.msra.mxu0 %v880
  %886 = vmatprep.subr.bf16.mxu0 0
  %887 = vmatpush1.bf16.msra.mxu0 %v881
  %888 = vmatprep.subr.bf16.mxu0 0
  %889 = vmatpush1.bf16.msra.mxu0 0
  %890 = vmatprep.subr.bf16.mxu0 0
  %891 = vmatpush1.bf16.msra.mxu0 0
  %892 = vmatprep.subr.bf16.mxu0 0
  %893 = vmatpush1.bf16.msra.mxu0 0
  %894 = vmatprep.subr.bf16.mxu0 0
  %895 = vmatpush1.bf16.msra.mxu0 0
  %896 = vmatprep.subr.bf16.mxu0 0
  %897 = vmatpush1.bf16.msra.mxu0 0
  %898 = vmatprep.subr.bf16.mxu0 0
  %899 = vmatpush1.bf16.msra.mxu0 0
  %900 = vmatprep.subr.bf16.mxu0 0
  %901 = vmatpush1.bf16.msra.mxu0 0
  %902 = vmatprep.subr.bf16.mxu0 0
  %903 = vmatpush1.bf16.msra.mxu0 0
  %904 = vmatprep.subr.bf16.mxu0 0
  %905 = vmatpush1.bf16.msra.mxu0 0
  %906 = vmatprep.subr.bf16.mxu0 0
  %907 = vmatpush1.bf16.msra.mxu0 0
  %908 = vmatprep.subr.bf16.mxu0 0
  %909 = vmatpush1.bf16.msra.mxu0 0
  %910 = vmatprep.subr.bf16.mxu0 0
  %911 = vmatpush1.bf16.msra.mxu0 0
  %912 = vmatprep.subr.bf16.mxu0 0
  %913 = vmatpush1.bf16.msra.mxu0 0
  %914 = vmatprep.subr.bf16.mxu0 0
  %915 = vmatpush1.bf16.msra.mxu0 0
  %916 = vmatprep.mubr.bf16.mxu0 0
  %917 = vmatmul.mubr.bf16.gmra.mrb[0].mxu0 %v810
  %v918 = vpop.f32.mrb[0].mxu0
  %v919 = vadd.f32 %v871, %v918
  %v920 = vpop.f32.mrb[0].mxu0
  %v921 = vpop.f32.mrb[0].mxu0
  %v922 = vadd.f32 %v871, %v921
  %v923 = vpop.f32.mrb[0].mxu0
  %924 = vmatprep.mubr.bf16.mxu0 0
  %925 = vmatmul.mubr.bf16.gmra.mrb[0].mxu0 %v813
  %v926 = vpop.f32.mrb[0].mxu0
  %v927 = vadd.f32 %v871, %v926
  %v928 = vpop.f32.mrb[0].mxu0
  %v929 = vpop.f32.mrb[0].mxu0
  %v930 = vadd.f32 %v871, %v929
  %v931 = vpop.f32.mrb[0].mxu0
  %932 = vdwg.mxu0
  %v933 = vpack.c.bf16 %v776, %v773
  %v934 = vpack.c.bf16 %v784, %v781
  %v935 = vpack.c.bf16 %v853, %v850
  %v936 = vpack.c.bf16 %v861, %v858
  %v938 = vsel %vm115, %v933, 0
  %v941 = vsel %vm115, %v935, 0
  %943 = vmatprep.subr.bf16.mxu0 0
  %944 = vmatpush1.bf16.xpose.msra.mxu0 %v941
  %945 = vmatprep.subr.bf16.mxu0 0
  %946 = vmatpush1.bf16.xpose.msra.mxu0 0
  %947 = vmatprep.subr.bf16.mxu0 0
  %948 = vmatpush1.bf16.xpose.msra.mxu0 0
  %949 = vmatprep.subr.bf16.mxu0 0
  %950 = vmatpush1.bf16.xpose.msra.mxu0 0
  %951 = vmatprep.subr.bf16.mxu0 0
  %952 = vmatpush1.bf16.xpose.msra.mxu0 0
  %953 = vmatprep.subr.bf16.mxu0 0
  %954 = vmatpush1.bf16.xpose.msra.mxu0 0
  %955 = vmatprep.subr.bf16.mxu0 0
  %956 = vmatpush1.bf16.xpose.msra.mxu0 0
  %957 = vmatprep.subr.bf16.mxu0 0
  %958 = vmatpush1.bf16.xpose.msra.mxu0 0
  %959 = vmatprep.subr.bf16.mxu0 0
  %960 = vmatpush1.bf16.xpose.msra.mxu0 0
  %961 = vmatprep.subr.bf16.mxu0 0
  %962 = vmatpush1.bf16.xpose.msra.mxu0 0
  %963 = vmatprep.subr.bf16.mxu0 0
  %964 = vmatpush1.bf16.xpose.msra.mxu0 0
  %965 = vmatprep.subr.bf16.mxu0 0
  %966 = vmatpush1.bf16.xpose.msra.mxu0 0
  %967 = vmatprep.subr.bf16.mxu0 0
  %968 = vmatpush1.bf16.xpose.msra.mxu0 0
  %969 = vmatprep.subr.bf16.mxu0 0
  %970 = vmatpush1.bf16.xpose.msra.mxu0 0
  %971 = vmatprep.subr.bf16.mxu0 0
  %972 = vmatpush1.bf16.xpose.msra.mxu0 0
  %973 = vmatprep.subr.bf16.mxu0 0
  %974 = vmatpush1.bf16.xpose.msra.mxu0 0
  %975 = vmatprep.mubr.bf16.mxu0 0
  %976 = vmatmul.mubr.bf16.gmra.mrb[0].mxu0 %v938
  %v977 = vpop.f32.mrb[0].mxu0
  %v978 = vadd.f32 0.0, %v977
  %v979 = vpop.f32.mrb[0].mxu0
  %v980 = vpop.f32.mrb[0].mxu0
  %v981 = vadd.f32 0.0, %v980
  %v982 = vpop.f32.mrb[0].mxu0
  %983 = vdwg.mxu0
  %v985 = vsel %vm115, %v934, 0
  %v988 = vsel %vm115, %v936, 0
  %990 = vmatprep.subr.bf16.mxu0 0
  %991 = vmatpush1.bf16.xpose.msra.mxu0 %v988
  %992 = vmatprep.subr.bf16.mxu0 0
  %993 = vmatpush1.bf16.xpose.msra.mxu0 0
  %994 = vmatprep.subr.bf16.mxu0 0
  %995 = vmatpush1.bf16.xpose.msra.mxu0 0
  %996 = vmatprep.subr.bf16.mxu0 0
  %997 = vmatpush1.bf16.xpose.msra.mxu0 0
  %998 = vmatprep.subr.bf16.mxu0 0
  %999 = vmatpush1.bf16.xpose.msra.mxu0 0
  %1000 = vmatprep.subr.bf16.mxu0 0
  %1001 = vmatpush1.bf16.xpose.msra.mxu0 0
  %1002 = vmatprep.subr.bf16.mxu0 0
  %1003 = vmatpush1.bf16.xpose.msra.mxu0 0
  %1004 = vmatprep.subr.bf16.mxu0 0
  %1005 = vmatpush1.bf16.xpose.msra.mxu0 0
  %1006 = vmatprep.subr.bf16.mxu0 0
  %1007 = vmatpush1.bf16.xpose.msra.mxu0 0
  %1008 = vmatprep.subr.bf16.mxu0 0
  %1009 = vmatpush1.bf16.xpose.msra.mxu0 0
  %1010 = vmatprep.subr.bf16.mxu0 0
  %1011 = vmatpush1.bf16.xpose.msra.mxu0 0
  %1012 = vmatprep.subr.bf16.mxu0 0
  %1013 = vmatpush1.bf16.xpose.msra.mxu0 0
  %1014 = vmatprep.subr.bf16.mxu0 0
  %1015 = vmatpush1.bf16.xpose.msra.mxu0 0
  %1016 = vmatprep.subr.bf16.mxu0 0
  %1017 = vmatpush1.bf16.xpose.msra.mxu0 0
  %1018 = vmatprep.subr.bf16.mxu0 0
  %1019 = vmatpush1.bf16.xpose.msra.mxu0 0
  %1020 = vmatprep.subr.bf16.mxu0 0
  %1021 = vmatpush1.bf16.xpose.msra.mxu0 0
  %1022 = vmatprep.mubr.bf16.mxu0 0
  %1023 = vmatmul.mubr.bf16.gmra.mrb[0].mxu0 %v985
  %v1024 = vpop.f32.mrb[0].mxu0
  %v1025 = vadd.f32 0.0, %v1024
  %v1026 = vpop.f32.mrb[0].mxu0
  %v1027 = vpop.f32.mrb[0].mxu0
  %v1028 = vadd.f32 0.0, %v1027
  %v1029 = vpop.f32.mrb[0].mxu0
  %1030 = vdwg.mxu0
  %v1031 = vsel %vm415, %v978, -inf
  %1032 = vmax.xlane.f32.xlu0 %v1031
  %v1033 = vpop.xlane.xlu0 %1032
  %v1034 = vsel %vm415, %v981, -inf
  %1035 = vmax.xlane.f32.xlu0 %v1034
  %v1036 = vpop.xlane.xlu0 %1035
  %v1037 = vsel %vm415, %v1025, -inf
  %1038 = vmax.xlane.f32.xlu0 %v1037
  %v1039 = vpop.xlane.xlu0 %1038
  %v1040 = vsel %vm415, %v1028, -inf
  %1041 = vmax.xlane.f32.xlu0 %v1040
  %v1042 = vpop.xlane.xlu0 %1041
  %v1043 = vsub.f32 %v978, %v1033
  %v1044 = vsub.f32 %v981, %v1036
  %v1045 = vsub.f32 %v1025, %v1039
  %v1046 = vsub.f32 %v1028, %v1042
  %v1047 = vmul.f32 %v1043, 1.442695
  %v1048 = vpow.pop %v1047
  %v1049 = vmul.f32 %v1044, 1.442695
  %v1050 = vpow.pop %v1049
  %v1051 = vmul.f32 %v1045, 1.442695
  %v1052 = vpow.pop %v1051
  %v1053 = vmul.f32 %v1046, 1.442695
  %v1054 = vpow.pop %v1053
  %v1055 = vsel %vm415, %v1048, 0.0
  %1056 = vadd.xlane.f32.xlu0 %v1055
  %v1057 = vpop.xlane.xlu0 %1056
  %v1058 = vsel %vm415, %v1050, 0.0
  %1059 = vadd.xlane.f32.xlu0 %v1058
  %v1060 = vpop.xlane.xlu0 %1059
  %v1061 = vsel %vm415, %v1052, 0.0
  %1062 = vadd.xlane.f32.xlu0 %v1061
  %v1063 = vpop.xlane.xlu0 %1062
  %v1064 = vsel %vm415, %v1054, 0.0
  %1065 = vadd.xlane.f32.xlu0 %v1064
  %v1066 = vpop.xlane.xlu0 %1065
  %v1067 = vrcp.pop %v1057
  %v1068 = vmul.f32 1.0, %v1067
  %v1069 = vrcp.pop %v1060
  %v1070 = vmul.f32 1.0, %v1069
  %v1071 = vrcp.pop %v1063
  %v1072 = vmul.f32 1.0, %v1071
  %v1073 = vrcp.pop %v1066
  %v1074 = vmul.f32 1.0, %v1073
  %v1075 = vmul.f32 %v1048, %v1068
  %v1076 = vmul.f32 %v1050, %v1070
  %v1077 = vmul.f32 %v1052, %v1072
  %v1078 = vmul.f32 %v1054, %v1074
  %v1079 = vpack.c.bf16 %v1076, %v1075
  %v1080 = vpack.c.bf16 %v1078, %v1077
  %v1081 = vpack.c.bf16 %v922, %v919
  %v1082 = vpack.c.bf16 %v930, %v927
  %v1084 = vsel %vm415, %v1079, 0
  %1086 = vmatprep.subr.bf16.mxu0 0
  %1087 = vmatpush1.bf16.msra.mxu0 %v1081
  %1088 = vmatprep.subr.bf16.mxu0 0
  %1089 = vmatpush1.bf16.msra.mxu0 0
  %1090 = vmatprep.subr.bf16.mxu0 0
  %1091 = vmatpush1.bf16.msra.mxu0 0
  %1092 = vmatprep.subr.bf16.mxu0 0
  %1093 = vmatpush1.bf16.msra.mxu0 0
  %1094 = vmatprep.subr.bf16.mxu0 0
  %1095 = vmatpush1.bf16.msra.mxu0 0
  %1096 = vmatprep.subr.bf16.mxu0 0
  %1097 = vmatpush1.bf16.msra.mxu0 0
  %1098 = vmatprep.subr.bf16.mxu0 0
  %1099 = vmatpush1.bf16.msra.mxu0 0
  %1100 = vmatprep.subr.bf16.mxu0 0
  %1101 = vmatpush1.bf16.msra.mxu0 0
  %1102 = vmatprep.subr.bf16.mxu0 0
  %1103 = vmatpush1.bf16.msra.mxu0 0
  %1104 = vmatprep.subr.bf16.mxu0 0
  %1105 = vmatpush1.bf16.msra.mxu0 0
  %1106 = vmatprep.subr.bf16.mxu0 0
  %1107 = vmatpush1.bf16.msra.mxu0 0
  %1108 = vmatprep.subr.bf16.mxu0 0
  %1109 = vmatpush1.bf16.msra.mxu0 0
  %1110 = vmatprep.subr.bf16.mxu0 0
  %1111 = vmatpush1.bf16.msra.mxu0 0
  %1112 = vmatprep.subr.bf16.mxu0 0
  %1113 = vmatpush1.bf16.msra.mxu0 0
  %1114 = vmatprep.subr.bf16.mxu0 0
  %1115 = vmatpush1.bf16.msra.mxu0 0
  %1116 = vmatprep.subr.bf16.mxu0 0
  %1117 = vmatpush1.bf16.msra.mxu0 0
  %1118 = vmatprep.mubr.bf16.mxu0 0
  %1119 = vmatmul.mubr.bf16.gmra.mrb[0].mxu0 %v1084
  %v1120 = vpop.f32.mrb[0].mxu0
  %v1121 = vadd.f32 0.0, %v1120
  %v1122 = vpop.f32.mrb[0].mxu0
  %v1123 = vpop.f32.mrb[0].mxu0
  %v1124 = vadd.f32 0.0, %v1123
  %v1125 = vpop.f32.mrb[0].mxu0
  %1126 = vdwg.mxu0
  %v1128 = vsel %vm415, %v1080, 0
  %1130 = vmatprep.subr.bf16.mxu0 0
  %1131 = vmatpush1.bf16.msra.mxu0 %v1082
  %1132 = vmatprep.subr.bf16.mxu0 0
  %1133 = vmatpush1.bf16.msra.mxu0 0
  %1134 = vmatprep.subr.bf16.mxu0 0
  %1135 = vmatpush1.bf16.msra.mxu0 0
  %1136 = vmatprep.subr.bf16.mxu0 0
  %1137 = vmatpush1.bf16.msra.mxu0 0
  %1138 = vmatprep.subr.bf16.mxu0 0
  %1139 = vmatpush1.bf16.msra.mxu0 0
  %1140 = vmatprep.subr.bf16.mxu0 0
  %1141 = vmatpush1.bf16.msra.mxu0 0
  %1142 = vmatprep.subr.bf16.mxu0 0
  %1143 = vmatpush1.bf16.msra.mxu0 0
  %1144 = vmatprep.subr.bf16.mxu0 0
  %1145 = vmatpush1.bf16.msra.mxu0 0
  %1146 = vmatprep.subr.bf16.mxu0 0
  %1147 = vmatpush1.bf16.msra.mxu0 0
  %1148 = vmatprep.subr.bf16.mxu0 0
  %1149 = vmatpush1.bf16.msra.mxu0 0
  %1150 = vmatprep.subr.bf16.mxu0 0
  %1151 = vmatpush1.bf16.msra.mxu0 0
  %1152 = vmatprep.subr.bf16.mxu0 0
  %1153 = vmatpush1.bf16.msra.mxu0 0
  %1154 = vmatprep.subr.bf16.mxu0 0
  %1155 = vmatpush1.bf16.msra.mxu0 0
  %1156 = vmatprep.subr.bf16.mxu0 0
  %1157 = vmatpush1.bf16.msra.mxu0 0
  %1158 = vmatprep.subr.bf16.mxu0 0
  %1159 = vmatpush1.bf16.msra.mxu0 0
  %1160 = vmatprep.subr.bf16.mxu0 0
  %1161 = vmatpush1.bf16.msra.mxu0 0
  %1162 = vmatprep.mubr.bf16.mxu0 0
  %1163 = vmatmul.mubr.bf16.gmra.mrb[0].mxu0 %v1128
  %v1164 = vpop.f32.mrb[0].mxu0
  %v1165 = vadd.f32 0.0, %v1164
  %v1166 = vpop.f32.mrb[0].mxu0
  %v1167 = vpop.f32.mrb[0].mxu0
  %v1168 = vadd.f32 0.0, %v1167
  %v1169 = vpop.f32.mrb[0].mxu0
  %1170 = vdwg.mxu0
  %v1171 = vpack.c.bf16 %v1124, %v1121
  %v1172 = vpack.c.bf16 %v1168, %v1165
  %v1173 = vld [vmem:[%s10] sm:$0xf]
  %v1174 = vld [vmem:[%s10 + $0x4] sm:$0xf]
  %v1175 = vld [vmem:[%s10 + $0x8] sm:$0xf]
  %v1176 = vld [vmem:[%s10 + $0xc] sm:$0xf]
  %v1177 = vlaneseq
  %v1178 = vshrl.u32 %v1177, 7
  %v1179 = vsub.s32 7, %v1178
  %v1180 = vrot.slane %v87, %v1179
  %v1185 = vunpack.c.l.b16 %v1173
  %v1186 = vunpack.c.l.b16 %v1174
  %v1187 = vunpack.c.l.b16 %v1175
  %v1188 = vunpack.c.l.b16 %v1176
  %v1189 = vpack.c.b16 %v1186, %v1185
  %v1190 = vpack.c.b16 %v1188, %v1187
  %v1194 = vsel %vm115, %v1171, 0
  %v1197 = vsel %vm115, %v1172, 0
  %1199 = vmatprep.subr.bf16.mxu0 0
  %1200 = vmatpush1.bf16.msra.mxu0 %v1189
  %1201 = vmatprep.subr.bf16.mxu0 0
  %1202 = vmatpush1.bf16.msra.mxu0 %v1190
  %1203 = vmatprep.subr.bf16.mxu0 0
  %1204 = vmatpush1.bf16.msra.mxu0 0
  %1205 = vmatprep.subr.bf16.mxu0 0
  %1206 = vmatpush1.bf16.msra.mxu0 0
  %1207 = vmatprep.subr.bf16.mxu0 0
  %1208 = vmatpush1.bf16.msra.mxu0 0
  %1209 = vmatprep.subr.bf16.mxu0 0
  %1210 = vmatpush1.bf16.msra.mxu0 0
  %1211 = vmatprep.subr.bf16.mxu0 0
  %1212 = vmatpush1.bf16.msra.mxu0 0
  %1213 = vmatprep.subr.bf16.mxu0 0
  %1214 = vmatpush1.bf16.msra.mxu0 0
  %1215 = vmatprep.subr.bf16.mxu0 0
  %1216 = vmatpush1.bf16.msra.mxu0 0
  %1217 = vmatprep.subr.bf16.mxu0 0
  %1218 = vmatpush1.bf16.msra.mxu0 0
  %1219 = vmatprep.subr.bf16.mxu0 0
  %1220 = vmatpush1.bf16.msra.mxu0 0
  %1221 = vmatprep.subr.bf16.mxu0 0
  %1222 = vmatpush1.bf16.msra.mxu0 0
  %1223 = vmatprep.subr.bf16.mxu0 0
  %1224 = vmatpush1.bf16.msra.mxu0 0
  %1225 = vmatprep.subr.bf16.mxu0 0
  %1226 = vmatpush1.bf16.msra.mxu0 0
  %1227 = vmatprep.subr.bf16.mxu0 0
  %1228 = vmatpush1.bf16.msra.mxu0 0
  %1229 = vmatprep.subr.bf16.mxu0 0
  %1230 = vmatpush1.bf16.msra.mxu0 0
  %1231 = vmatprep.mubr.bf16.mxu0 0
  %1232 = vmatmul.mubr.bf16.gmra.mrb[0].mxu0 %v1194
  %v1233 = vpop.f32.mrb[0].mxu0
  %v1234 = vadd.f32 %v1180, %v1233
  %v1235 = vpop.f32.mrb[0].mxu0
  %v1236 = vpop.f32.mrb[0].mxu0
  %v1237 = vadd.f32 %v1180, %v1236
  %v1238 = vpop.f32.mrb[0].mxu0
  %1239 = vmatprep.mubr.bf16.mxu0 0
  %1240 = vmatmul.mubr.bf16.gmra.mrb[0].mxu0 %v1197
  %v1241 = vpop.f32.mrb[0].mxu0
  %v1242 = vadd.f32 %v1180, %v1241
  %v1243 = vpop.f32.mrb[0].mxu0
  %v1244 = vpop.f32.mrb[0].mxu0
  %v1245 = vadd.f32 %v1180, %v1244
  %v1246 = vpop.f32.mrb[0].mxu0
  %1247 = vdwg.mxu0
  %v1248 = vadd.f32 %v702, %v1234
  %v1249 = vadd.f32 %v703, %v1237
  %v1250 = vadd.f32 %v704, %v1242
  %v1251 = vadd.f32 %v705, %v1245
  %v1252 = vsel %vm115, %v1248, 0.0
  %1253 = vadd.xlane.f32.xlu0 %v1252
  %v1254 = vpop.xlane.xlu0 %1253
  %v1255 = vsel %vm115, %v1249, 0.0
  %1256 = vadd.xlane.f32.xlu0 %v1255
  %v1257 = vpop.xlane.xlu0 %1256
  %v1258 = vsel %vm115, %v1250, 0.0
  %1259 = vadd.xlane.f32.xlu0 %v1258
  %v1260 = vpop.xlane.xlu0 %1259
  %v1261 = vsel %vm115, %v1251, 0.0
  %1262 = vadd.xlane.f32.xlu0 %v1261
  %v1263 = vpop.xlane.xlu0 %1262
  %v1264 = vmul.f32 %v1254, %v649
  %v1265 = vmul.f32 %v1257, %v649
  %v1266 = vmul.f32 %v1260, %v649
  %v1267 = vmul.f32 %v1263, %v649
  %v1268 = vsub.f32 %v1248, %v1264
  %v1269 = vsub.f32 %v1249, %v1265
  %v1270 = vsub.f32 %v1250, %v1266
  %v1271 = vsub.f32 %v1251, %v1267
  %v1272 = vmul.f32 %v1268, %v1268
  %v1273 = vmul.f32 %v1269, %v1269
  %v1274 = vmul.f32 %v1270, %v1270
  %v1275 = vmul.f32 %v1271, %v1271
  %v1276 = vsel %vm115, %v1272, 0.0
  %1277 = vadd.xlane.f32.xlu0 %v1276
  %v1278 = vpop.xlane.xlu0 %1277
  %v1279 = vsel %vm115, %v1273, 0.0
  %1280 = vadd.xlane.f32.xlu0 %v1279
  %v1281 = vpop.xlane.xlu0 %1280
  %v1282 = vsel %vm115, %v1274, 0.0
  %1283 = vadd.xlane.f32.xlu0 %v1282
  %v1284 = vpop.xlane.xlu0 %1283
  %v1285 = vsel %vm115, %v1275, 0.0
  %1286 = vadd.xlane.f32.xlu0 %v1285
  %v1287 = vpop.xlane.xlu0 %1286
  %v1288 = vmul.f32 %v1278, %v649
  %v1289 = vmul.f32 %v1281, %v649
  %v1290 = vmul.f32 %v1284, %v649
  %v1291 = vmul.f32 %v1287, %v649
  %v1292 = vadd.f32 %v1288, 1e-05
  %v1293 = vadd.f32 %v1289, 1e-05
  %v1294 = vadd.f32 %v1290, 1e-05
  %v1295 = vadd.f32 %v1291, 1e-05
  %v1296 = vrsqrt.pop %v1292
  %v1297 = vrsqrt.pop %v1293
  %v1298 = vrsqrt.pop %v1294
  %v1299 = vrsqrt.pop %v1295
  %v1300 = vmul.f32 %v1268, %v1296
  %v1301 = vmul.f32 %v1269, %v1297
  %v1302 = vmul.f32 %v1270, %v1298
  %v1303 = vmul.f32 %v1271, %v1299
  %v1304 = vlaneseq
  %v1305 = vshrl.u32 %v1304, 7
  %v1306 = vsub.s32 3, %v1305
  %v1307 = vrot.slane %v88, %v1306
  %v1308 = vmul.f32 %v1300, %v1307
  %v1309 = vmul.f32 %v1301, %v1307
  %v1310 = vmul.f32 %v1302, %v1307
  %v1311 = vmul.f32 %v1303, %v1307
  %v1312 = vlaneseq
  %v1313 = vshrl.u32 %v1312, 7
  %v1314 = vsub.s32 4, %v1313
  %v1315 = vrot.slane %v88, %v1314
  %v1316 = vadd.f32 %v1308, %v1315
  %v1317 = vadd.f32 %v1309, %v1315
  %v1318 = vadd.f32 %v1310, %v1315
  %v1319 = vadd.f32 %v1311, %v1315
  %v1320 = vld [vmem:[%s12] sm:$0x1]
  %v1321 = vpack.c.bf16 %v1317, %v1316
  %v1322 = vpack.c.bf16 %v1319, %v1318
  %v1323 = vld [vmem:[%s11] sm:$0xf]
  %v1324 = vld [vmem:[%s11 + $0x4] sm:$0xf]
  %v1325 = vld [vmem:[%s11 + $0x8] sm:$0xf]
  %v1326 = vld [vmem:[%s11 + $0xc] sm:$0xf]
  %v1328 = vlaneseq
  %v1329 = vshrl.u32 %v1328, 7
  %v1330 = vsub.s32 0, %v1329
  %v1331 = vrot.slane %v1320, %v1330
  %v1337 = vunpack.c.l.b16 %v1323
  %v1338 = vunpack.c.l.b16 %v1324
  %v1339 = vunpack.c.l.b16 %v1325
  %v1340 = vunpack.c.l.b16 %v1326
  %v1341 = vpack.c.b16 %v1338, %v1337
  %v1342 = vpack.c.b16 %v1340, %v1339
  %v1346 = vsel %vm115, %v1321, 0
  %v1349 = vsel %vm115, %v1322, 0
  %1351 = vmatprep.subr.bf16.mxu0 0
  %1352 = vmatpush1.bf16.msra.mxu0 %v1341
  %1353 = vmatprep.subr.bf16.mxu0 0
  %1354 = vmatpush1.bf16.msra.mxu0 %v1342
  %1355 = vmatprep.subr.bf16.mxu0 0
  %1356 = vmatpush1.bf16.msra.mxu0 0
  %1357 = vmatprep.subr.bf16.mxu0 0
  %1358 = vmatpush1.bf16.msra.mxu0 0
  %1359 = vmatprep.subr.bf16.mxu0 0
  %1360 = vmatpush1.bf16.msra.mxu0 0
  %1361 = vmatprep.subr.bf16.mxu0 0
  %1362 = vmatpush1.bf16.msra.mxu0 0
  %1363 = vmatprep.subr.bf16.mxu0 0
  %1364 = vmatpush1.bf16.msra.mxu0 0
  %1365 = vmatprep.subr.bf16.mxu0 0
  %1366 = vmatpush1.bf16.msra.mxu0 0
  %1367 = vmatprep.subr.bf16.mxu0 0
  %1368 = vmatpush1.bf16.msra.mxu0 0
  %1369 = vmatprep.subr.bf16.mxu0 0
  %1370 = vmatpush1.bf16.msra.mxu0 0
  %1371 = vmatprep.subr.bf16.mxu0 0
  %1372 = vmatpush1.bf16.msra.mxu0 0
  %1373 = vmatprep.subr.bf16.mxu0 0
  %1374 = vmatpush1.bf16.msra.mxu0 0
  %1375 = vmatprep.subr.bf16.mxu0 0
  %1376 = vmatpush1.bf16.msra.mxu0 0
  %1377 = vmatprep.subr.bf16.mxu0 0
  %1378 = vmatpush1.bf16.msra.mxu0 0
  %1379 = vmatprep.subr.bf16.mxu0 0
  %1380 = vmatpush1.bf16.msra.mxu0 0
  %1381 = vmatprep.subr.bf16.mxu0 0
  %1382 = vmatpush1.bf16.msra.mxu0 0
  %1383 = vmatprep.mubr.bf16.mxu0 0
  %1384 = vmatmul.mubr.bf16.gmra.mrb[0].mxu0 %v1346
  %v1385 = vpop.f32.mrb[0].mxu0
  %v1386 = vadd.f32 %v1331, %v1385
  %v1387 = vpop.f32.mrb[0].mxu0
  %v1388 = vpop.f32.mrb[0].mxu0
  %v1389 = vadd.f32 %v1331, %v1388
  %v1390 = vpop.f32.mrb[0].mxu0
  %1391 = vmatprep.mubr.bf16.mxu0 0
  %1392 = vmatmul.mubr.bf16.gmra.mrb[0].mxu0 %v1349
  %v1393 = vpop.f32.mrb[0].mxu0
  %v1394 = vadd.f32 %v1331, %v1393
  %v1395 = vpop.f32.mrb[0].mxu0
  %v1396 = vpop.f32.mrb[0].mxu0
  %v1397 = vadd.f32 %v1331, %v1396
  %v1398 = vpop.f32.mrb[0].mxu0
  %1399 = vdwg.mxu0
  %v1400 = vmax.f32 %v1386, 0.0
  %v1401 = vmax.f32 %v1389, 0.0
  %v1402 = vmax.f32 %v1394, 0.0
  %v1403 = vmax.f32 %v1397, 0.0
  %v1404 = vpack.c.bf16 %v1401, %v1400
  %v1405 = vpack.c.bf16 %v1403, %v1402
  %v1406 = vld [vmem:[%s13] sm:$0xf]
  %v1407 = vld [vmem:[%s13 + $0x4] sm:$0xf]
  %v1408 = vld [vmem:[%s13 + $0x8] sm:$0xf]
  %v1409 = vld [vmem:[%s13 + $0xc] sm:$0xf]
  %v1410 = vld [vmem:[%s13 + $0x10] sm:$0xf]
  %v1411 = vld [vmem:[%s13 + $0x14] sm:$0xf]
  %v1412 = vld [vmem:[%s13 + $0x18] sm:$0xf]
  %v1413 = vld [vmem:[%s13 + $0x1c] sm:$0xf]
  %v1414 = vlaneseq
  %v1415 = vshrl.u32 %v1414, 7
  %v1416 = vsub.s32 0, %v1415
  %v1417 = vrot.slane %v88, %v1416
  %v1426 = vunpack.c.l.b16 %v1406
  %v1427 = vunpack.c.l.b16 %v1407
  %v1428 = vunpack.c.l.b16 %v1408
  %v1429 = vunpack.c.l.b16 %v1409
  %v1430 = vunpack.c.l.b16 %v1410
  %v1431 = vunpack.c.l.b16 %v1411
  %v1432 = vunpack.c.l.b16 %v1412
  %v1433 = vunpack.c.l.b16 %v1413
  %v1434 = vpack.c.b16 %v1427, %v1426
  %v1435 = vpack.c.b16 %v1429, %v1428
  %v1436 = vpack.c.b16 %v1431, %v1430
  %v1437 = vpack.c.b16 %v1433, %v1432
  %vm1442 = vcmask 523264
  %v1444 = vsel %vm1442, %v1404, 0
  %v1447 = vsel %vm1442, %v1405, 0
  %1449 = vmatprep.subr.bf16.mxu0 0
  %1450 = vmatpush1.bf16.msra.mxu0 %v1434
  %1451 = vmatprep.subr.bf16.mxu0 0
  %1452 = vmatpush1.bf16.msra.mxu0 %v1435
  %1453 = vmatprep.subr.bf16.mxu0 0
  %1454 = vmatpush1.bf16.msra.mxu0 %v1436
  %1455 = vmatprep.subr.bf16.mxu0 0
  %1456 = vmatpush1.bf16.msra.mxu0 %v1437
  %1457 = vmatprep.subr.bf16.mxu0 0
  %1458 = vmatpush1.bf16.msra.mxu0 0
  %1459 = vmatprep.subr.bf16.mxu0 0
  %1460 = vmatpush1.bf16.msra.mxu0 0
  %1461 = vmatprep.subr.bf16.mxu0 0
  %1462 = vmatpush1.bf16.msra.mxu0 0
  %1463 = vmatprep.subr.bf16.mxu0 0
  %1464 = vmatpush1.bf16.msra.mxu0 0
  %1465 = vmatprep.subr.bf16.mxu0 0
  %1466 = vmatpush1.bf16.msra.mxu0 0
  %1467 = vmatprep.subr.bf16.mxu0 0
  %1468 = vmatpush1.bf16.msra.mxu0 0
  %1469 = vmatprep.subr.bf16.mxu0 0
  %1470 = vmatpush1.bf16.msra.mxu0 0
  %1471 = vmatprep.subr.bf16.mxu0 0
  %1472 = vmatpush1.bf16.msra.mxu0 0
  %1473 = vmatprep.subr.bf16.mxu0 0
  %1474 = vmatpush1.bf16.msra.mxu0 0
  %1475 = vmatprep.subr.bf16.mxu0 0
  %1476 = vmatpush1.bf16.msra.mxu0 0
  %1477 = vmatprep.subr.bf16.mxu0 0
  %1478 = vmatpush1.bf16.msra.mxu0 0
  %1479 = vmatprep.subr.bf16.mxu0 0
  %1480 = vmatpush1.bf16.msra.mxu0 0
  %1481 = vmatprep.mubr.bf16.mxu0 0
  %1482 = vmatmul.mubr.bf16.gmra.mrb[0].mxu0 %v1444
  %v1483 = vpop.f32.mrb[0].mxu0
  %v1484 = vadd.f32 %v1417, %v1483
  %v1485 = vpop.f32.mrb[0].mxu0
  %v1486 = vpop.f32.mrb[0].mxu0
  %v1487 = vadd.f32 %v1417, %v1486
  %v1488 = vpop.f32.mrb[0].mxu0
  %1489 = vmatprep.mubr.bf16.mxu0 0
  %1490 = vmatmul.mubr.bf16.gmra.mrb[0].mxu0 %v1447
  %v1491 = vpop.f32.mrb[0].mxu0
  %v1492 = vadd.f32 %v1417, %v1491
  %v1493 = vpop.f32.mrb[0].mxu0
  %v1494 = vpop.f32.mrb[0].mxu0
  %v1495 = vadd.f32 %v1417, %v1494
  %v1496 = vpop.f32.mrb[0].mxu0
  %1497 = vdwg.mxu0
  %v1498 = vadd.f32 %v1316, %v1484
  %v1499 = vadd.f32 %v1317, %v1487
  %v1500 = vadd.f32 %v1318, %v1492
  %v1501 = vadd.f32 %v1319, %v1495
  %v1502 = vsel %vm115, %v1498, 0.0
  %1503 = vadd.xlane.f32.xlu0 %v1502
  %v1504 = vpop.xlane.xlu0 %1503
  %v1505 = vsel %vm115, %v1499, 0.0
  %1506 = vadd.xlane.f32.xlu0 %v1505
  %v1507 = vpop.xlane.xlu0 %1506
  %v1508 = vsel %vm115, %v1500, 0.0
  %1509 = vadd.xlane.f32.xlu0 %v1508
  %v1510 = vpop.xlane.xlu0 %1509
  %v1511 = vsel %vm115, %v1501, 0.0
  %1512 = vadd.xlane.f32.xlu0 %v1511
  %v1513 = vpop.xlane.xlu0 %1512
  %v1514 = vmul.f32 %v1504, %v649
  %v1515 = vmul.f32 %v1507, %v649
  %v1516 = vmul.f32 %v1510, %v649
  %v1517 = vmul.f32 %v1513, %v649
  %v1518 = vsub.f32 %v1498, %v1514
  %v1519 = vsub.f32 %v1499, %v1515
  %v1520 = vsub.f32 %v1500, %v1516
  %v1521 = vsub.f32 %v1501, %v1517
  %v1522 = vmul.f32 %v1518, %v1518
  %v1523 = vmul.f32 %v1519, %v1519
  %v1524 = vmul.f32 %v1520, %v1520
  %v1525 = vmul.f32 %v1521, %v1521
  %v1526 = vsel %vm115, %v1522, 0.0
  %1527 = vadd.xlane.f32.xlu0 %v1526
  %v1528 = vpop.xlane.xlu0 %1527
  %v1529 = vsel %vm115, %v1523, 0.0
  %1530 = vadd.xlane.f32.xlu0 %v1529
  %v1531 = vpop.xlane.xlu0 %1530
  %v1532 = vsel %vm115, %v1524, 0.0
  %1533 = vadd.xlane.f32.xlu0 %v1532
  %v1534 = vpop.xlane.xlu0 %1533
  %v1535 = vsel %vm115, %v1525, 0.0
  %1536 = vadd.xlane.f32.xlu0 %v1535
  %v1537 = vpop.xlane.xlu0 %1536
  %v1538 = vmul.f32 %v1528, %v649
  %v1539 = vmul.f32 %v1531, %v649
  %v1540 = vmul.f32 %v1534, %v649
  %v1541 = vmul.f32 %v1537, %v649
  %v1542 = vadd.f32 %v1538, 1e-05
  %v1543 = vadd.f32 %v1539, 1e-05
  %v1544 = vadd.f32 %v1540, 1e-05
  %v1545 = vadd.f32 %v1541, 1e-05
  %v1546 = vrsqrt.pop %v1542
  %v1547 = vrsqrt.pop %v1543
  %v1548 = vrsqrt.pop %v1544
  %v1549 = vrsqrt.pop %v1545
  %v1550 = vmul.f32 %v1518, %v1546
  %v1551 = vmul.f32 %v1519, %v1547
  %v1552 = vmul.f32 %v1520, %v1548
  %v1553 = vmul.f32 %v1521, %v1549
  %v1554 = vlaneseq
  %v1555 = vshrl.u32 %v1554, 7
  %v1556 = vsub.s32 5, %v1555
  %v1557 = vrot.slane %v88, %v1556
  %v1558 = vmul.f32 %v1550, %v1557
  %v1559 = vmul.f32 %v1551, %v1557
  %v1560 = vmul.f32 %v1552, %v1557
  %v1561 = vmul.f32 %v1553, %v1557
  %v1562 = vlaneseq
  %v1563 = vshrl.u32 %v1562, 7
  %v1564 = vsub.s32 6, %v1563
  %v1565 = vrot.slane %v88, %v1564
  %v1566 = vadd.f32 %v1558, %v1565
  %v1567 = vadd.f32 %v1559, %v1565
  %v1568 = vadd.f32 %v1560, %v1565
  %v1569 = vadd.f32 %v1561, %v1565
  %v1570 = vadd.f32 %v75, %v1566
  %v1571 = vadd.f32 %v76, %v1567
  %v1572 = vadd.f32 %v77, %v1568
  %v1573 = vadd.f32 %v78, %v1569
  %v1574 = vld [vmem:[%s15] sm:$0x3]
  %v1575 = vpack.c.bf16 %v1571, %v1570
  %v1576 = vpack.c.bf16 %v1573, %v1572
  %v1577 = vld [vmem:[%s14] sm:$0xff]
  %v1578 = vld [vmem:[%s14 + $0x8] sm:$0xff]
  %v1579 = vld [vmem:[%s14 + $0x10] sm:$0xff]
  %v1580 = vld [vmem:[%s14 + $0x18] sm:$0xff]
  %v1582 = vlaneseq
  %v1583 = vshrl.u32 %v1582, 7
  %v1584 = vsub.s32 0, %v1583
  %v1585 = vrot.slane %v1574, %v1584
  %v1586 = vlaneseq
  %v1587 = vshrl.u32 %v1586, 7
  %v1588 = vsub.s32 1, %v1587
  %v1589 = vrot.slane %v1574, %v1588
  %v1596 = vunpack.c.l.b16 %v1577
  %v1597 = vunpack.c.h.b16 %v1577
  %v1598 = vunpack.c.l.b16 %v1578
  %v1599 = vunpack.c.h.b16 %v1578
  %v1600 = vunpack.c.l.b16 %v1579
  %v1601 = vunpack.c.h.b16 %v1579
  %v1602 = vunpack.c.l.b16 %v1580
  %v1603 = vunpack.c.h.b16 %v1580
  %v1604 = vpack.c.b16 %v1598, %v1596
  %v1605 = vpack.c.b16 %v1599, %v1597
  %v1606 = vpack.c.b16 %v1602, %v1600
  %v1607 = vpack.c.b16 %v1603, %v1601
  %v1613 = vsel %vm115, %v1575, 0
  %v1616 = vsel %vm115, %v1576, 0
  %1618 = vmatprep.subr.bf16.mxu0 %v1605
  %1619 = vmatpush1.bf16.msra.mxu0 %v1604
  %1620 = vmatprep.subr.bf16.mxu0 %v1607
  %1621 = vmatpush1.bf16.msra.mxu0 %v1606
  %1622 = vmatprep.subr.bf16.mxu0 0
  %1623 = vmatpush1.bf16.msra.mxu0 0
  %1624 = vmatprep.subr.bf16.mxu0 0
  %1625 = vmatpush1.bf16.msra.mxu0 0
  %1626 = vmatprep.subr.bf16.mxu0 0
  %1627 = vmatpush1.bf16.msra.mxu0 0
  %1628 = vmatprep.subr.bf16.mxu0 0
  %1629 = vmatpush1.bf16.msra.mxu0 0
  %1630 = vmatprep.subr.bf16.mxu0 0
  %1631 = vmatpush1.bf16.msra.mxu0 0
  %1632 = vmatprep.subr.bf16.mxu0 0
  %1633 = vmatpush1.bf16.msra.mxu0 0
  %1634 = vmatprep.subr.bf16.mxu0 0
  %1635 = vmatpush1.bf16.msra.mxu0 0
  %1636 = vmatprep.subr.bf16.mxu0 0
  %1637 = vmatpush1.bf16.msra.mxu0 0
  %1638 = vmatprep.subr.bf16.mxu0 0
  %1639 = vmatpush1.bf16.msra.mxu0 0
  %1640 = vmatprep.subr.bf16.mxu0 0
  %1641 = vmatpush1.bf16.msra.mxu0 0
  %1642 = vmatprep.subr.bf16.mxu0 0
  %1643 = vmatpush1.bf16.msra.mxu0 0
  %1644 = vmatprep.subr.bf16.mxu0 0
  %1645 = vmatpush1.bf16.msra.mxu0 0
  %1646 = vmatprep.subr.bf16.mxu0 0
  %1647 = vmatpush1.bf16.msra.mxu0 0
  %1648 = vmatprep.subr.bf16.mxu0 0
  %1649 = vmatpush1.bf16.msra.mxu0 0
  %1650 = vmatprep.mubr.bf16.mxu0 0
  %1651 = vmatmul.mubr.bf16.gmra.mrb[0].mxu0 %v1613
  %v1652 = vpop.f32.mrb[0].mxu0
  %v1653 = vadd.f32 %v1585, %v1652
  %v1654 = vpop.f32.mrb[0].mxu0
  %v1655 = vadd.f32 %v1589, %v1654
  %v1656 = vpop.f32.mrb[0].mxu0
  %v1657 = vadd.f32 %v1585, %v1656
  %v1658 = vpop.f32.mrb[0].mxu0
  %v1659 = vadd.f32 %v1589, %v1658
  %1660 = vmatprep.mubr.bf16.mxu0 0
  %1661 = vmatmul.mubr.bf16.gmra.mrb[0].mxu0 %v1616
  %v1662 = vpop.f32.mrb[0].mxu0
  %v1663 = vadd.f32 %v1585, %v1662
  %v1664 = vpop.f32.mrb[0].mxu0
  %v1665 = vadd.f32 %v1589, %v1664
  %v1666 = vpop.f32.mrb[0].mxu0
  %v1667 = vadd.f32 %v1585, %v1666
  %v1668 = vpop.f32.mrb[0].mxu0
  %v1669 = vadd.f32 %v1589, %v1668
  %1670 = vdwg.mxu0
  %v1671 = vmax.f32 %v1655, 0.0
  %v1672 = vmax.f32 %v1659, 0.0
  %v1673 = vmax.f32 %v1665, 0.0
  %v1674 = vmax.f32 %v1669, 0.0
  %v1675 = vld [vmem:[%s17] sm:$0x1]
  %v1676 = vpack.c.bf16 %v1672, %v1671
  %v1677 = vpack.c.bf16 %v1674, %v1673
  %v1678 = vld [vmem:[%s16] sm:$0xf]
  %v1679 = vld [vmem:[%s16 + $0x4] sm:$0xf]
  %v1680 = vld [vmem:[%s16 + $0x8] sm:$0xf]
  %v1681 = vld [vmem:[%s16 + $0xc] sm:$0xf]
  %v1683 = vlaneseq
  %v1684 = vshrl.u32 %v1683, 7
  %v1685 = vsub.s32 0, %v1684
  %v1686 = vrot.slane %v1675, %v1685
  %v1692 = vunpack.c.l.b16 %v1678
  %v1693 = vunpack.c.l.b16 %v1679
  %v1694 = vunpack.c.l.b16 %v1680
  %v1695 = vunpack.c.l.b16 %v1681
  %v1696 = vpack.c.b16 %v1693, %v1692
  %v1697 = vpack.c.b16 %v1695, %v1694
  %v1701 = vsel %vm115, %v1676, 0
  %v1704 = vsel %vm115, %v1677, 0
  %1706 = vmatprep.subr.bf16.mxu0 0
  %1707 = vmatpush1.bf16.msra.mxu0 %v1696
  %1708 = vmatprep.subr.bf16.mxu0 0
  %1709 = vmatpush1.bf16.msra.mxu0 %v1697
  %1710 = vmatprep.subr.bf16.mxu0 0
  %1711 = vmatpush1.bf16.msra.mxu0 0
  %1712 = vmatprep.subr.bf16.mxu0 0
  %1713 = vmatpush1.bf16.msra.mxu0 0
  %1714 = vmatprep.subr.bf16.mxu0 0
  %1715 = vmatpush1.bf16.msra.mxu0 0
  %1716 = vmatprep.subr.bf16.mxu0 0
  %1717 = vmatpush1.bf16.msra.mxu0 0
  %1718 = vmatprep.subr.bf16.mxu0 0
  %1719 = vmatpush1.bf16.msra.mxu0 0
  %1720 = vmatprep.subr.bf16.mxu0 0
  %1721 = vmatpush1.bf16.msra.mxu0 0
  %1722 = vmatprep.subr.bf16.mxu0 0
  %1723 = vmatpush1.bf16.msra.mxu0 0
  %1724 = vmatprep.subr.bf16.mxu0 0
  %1725 = vmatpush1.bf16.msra.mxu0 0
  %1726 = vmatprep.subr.bf16.mxu0 0
  %1727 = vmatpush1.bf16.msra.mxu0 0
  %1728 = vmatprep.subr.bf16.mxu0 0
  %1729 = vmatpush1.bf16.msra.mxu0 0
  %1730 = vmatprep.subr.bf16.mxu0 0
  %1731 = vmatpush1.bf16.msra.mxu0 0
  %1732 = vmatprep.subr.bf16.mxu0 0
  %1733 = vmatpush1.bf16.msra.mxu0 0
  %1734 = vmatprep.subr.bf16.mxu0 0
  %1735 = vmatpush1.bf16.msra.mxu0 0
  %1736 = vmatprep.subr.bf16.mxu0 0
  %1737 = vmatpush1.bf16.msra.mxu0 0
  %1738 = vmatprep.mubr.bf16.mxu0 0
  %1739 = vmatmul.mubr.bf16.gmra.mrb[0].mxu0 %v1701
  %v1740 = vpop.f32.mrb[0].mxu0
  %v1741 = vadd.f32 %v1686, %v1740
  %v1742 = vpop.f32.mrb[0].mxu0
  %v1743 = vpop.f32.mrb[0].mxu0
  %v1744 = vadd.f32 %v1686, %v1743
  %v1745 = vpop.f32.mrb[0].mxu0
  %1746 = vmatprep.mubr.bf16.mxu0 0
  %1747 = vmatmul.mubr.bf16.gmra.mrb[0].mxu0 %v1704
  %v1748 = vpop.f32.mrb[0].mxu0
  %v1749 = vadd.f32 %v1686, %v1748
  %v1750 = vpop.f32.mrb[0].mxu0
  %v1751 = vpop.f32.mrb[0].mxu0
  %v1752 = vadd.f32 %v1686, %v1751
  %v1753 = vpop.f32.mrb[0].mxu0
  %1754 = vdwg.mxu0
  %v1755 = vadd.f32 %v1653, %v1741
  %v1756 = vadd.f32 %v1657, %v1744
  %v1757 = vadd.f32 %v1663, %v1749
  %v1758 = vadd.f32 %v1667, %v1752
  %vm1759 = vcmask 64512
  %1760 = vst.msk [vmem:[%s19] sm:$0xff] %vm1759, %v1755
  %1761 = vst.msk [vmem:[%s19 + $0x8] sm:$0xff] %vm1759, %v1756
  %1762 = vst.msk [vmem:[%s19 + $0x10] sm:$0xff] %vm1759, %v1757
  %1763 = vst.msk [vmem:[%s19 + $0x18] sm:$0xff] %vm1759, %v1758
  // Predicated region
  $region78: #{_trdecoder_impl.1} parent=0 // pred_check
    _
  $region79: #{_trdecoder_impl.1} parent=0 // pred_check_branch
    %1765 = sbr.rel (0) target = $region81
  $region80: #{_trdecoder_impl.1} parent=0 // pred_region
    _
  $region81: #{_trdecoder_impl.1} parent=0 // pred_fallthru
    _
  // Predicated region
  $region82: #{_trdecoder_impl.1} parent=0 // pred_check
    _
  $region83: #{_trdecoder_impl.1} parent=0 // pred_check_branch
    %1767 = sbr.rel (0) target = $region85
  $region84: #{_trdecoder_impl.1} parent=0 // pred_region
    _
  $region85: #{_trdecoder_impl.1} parent=0 // pred_fallthru
    _

</llo_original>
